<compile_context>
chip_gen: v6e
topology: v6e:2x2x1
jax: 0.10.0
libtpu: 0.0.40
codegen_flags: <defaults>
</compile_context>

<pallas_src>
import numpy as np
import jax
import jax.numpy as jnp
from jax.experimental import pallas as pl
from jax.experimental.pallas import tpu as pltpu

# ---------------- configuration (matches classifier's hard-coded 352 input) ----------------
W1K, W2K = 2, 6
W3K = W2K                     # original module sets self.w3 = w2
STRIDE = 2
COUT = 8
CIN = 2
T = 32                        # gaze sequence length
NUM_CLASSES = 2

L1 = (T - W1K) // STRIDE + 1  # 16
L2 = (T - W2K) // STRIDE + 1  # 14
L3 = (T - W3K) // STRIDE + 1  # 14
FEAT = COUT * (L1 + L2 + L3)  # 352
FEAT_PAD = 384                # 3 * 128 (lane-dense)
XDIM = 3 * CIN * T            # 192 (concat of the three flattened gaze inputs)
H1 = 512
H2 = 64
H2_PAD = 128
OUT_PAD = 128


def _round_up(a, b):
    return (a + b - 1) // b * b


# ---------------------------------- fused Pallas kernel -------------------------------------
def _fused_kernel(x_ref, wt_ref, bt_ref, w1_ref, b1_ref, w2_ref, b2_ref, w3_ref, b3_ref,
                  o_ref):
    # x: (tile, 192) f32; all weights bf16 (resident); biases f32.
    x = x_ref[...].astype(jnp.bfloat16)

    # block-diagonal Toeplitz matmul == the three Conv1d(2,8,k,2) encoders, fused
    f = jnp.dot(x, wt_ref[...], preferred_element_type=jnp.float32) + bt_ref[...]
    f = jnp.maximum(f, 0.0)                                            # (tile, 384)

    h = jnp.dot(f.astype(jnp.bfloat16), w1_ref[...],
                preferred_element_type=jnp.float32) + b1_ref[...]      # Linear(352->512)
    h = jnp.maximum(h, 0.0)

    h = jnp.dot(h.astype(jnp.bfloat16), w2_ref[...],
                preferred_element_type=jnp.float32) + b2_ref[...]      # Linear(512->64), padded
    h = jnp.maximum(h, 0.0)

    o_ref[...] = jnp.dot(h.astype(jnp.bfloat16), w3_ref[...],
                         preferred_element_type=jnp.float32) + b3_ref[...]  # Linear(64->2), padded


# ---------------------------------- wrapper --------------------------------------------------
def gaze_encoder_ms_forward(packed, x1, x2, x3):
    """x1/x2/x3: (N, 2, 32) f32. Returns (N, 2) logits."""
    n = x1.shape[0]
    # channel-major flatten (matches the (Cin, T) indexing used to build the Toeplitz matrix)
    x_all = jnp.concatenate(
        (x1.reshape(n, CIN * T), x2.reshape(n, CIN * T), x3.reshape(n, CIN * T)),
        axis=1).astype(jnp.float32)                                    # (N, 192)

    tile = min(512, _round_up(max(n, 1), 8))
    n_pad = _round_up(n, tile)
    if n_pad != n:
        x_all = jnp.pad(x_all, ((0, n_pad - n), (0, 0)))

    resident = lambda shape: pl.BlockSpec(shape, lambda i: (0, 0))

    out = pl.pallas_call(
        _fused_kernel,
        out_shape=jax.ShapeDtypeStruct((n_pad, OUT_PAD), jnp.float32),
        grid=(n_pad // tile,),
        in_specs=[
            pl.BlockSpec((tile, XDIM), lambda i: (i, 0)),              # activations, tiled on rows
            resident((XDIM, FEAT_PAD)), resident((1, FEAT_PAD)),       # fused conv weights/bias
            resident((FEAT_PAD, H1)),   resident((1, H1)),             # Linear(352,512)
            resident((H1, H2_PAD)),     resident((1, H2_PAD)),         # Linear(512,64) padded
            resident((H2_PAD, OUT_PAD)), resident((1, OUT_PAD)),       # Linear(64,2) padded
        ],
        out_specs=pl.BlockSpec((tile, OUT_PAD), lambda i: (i, 0)),
        compiler_params=pltpu.CompilerParams(dimension_semantics=("parallel",)),
    )(x_all, packed["wt"], packed["bt"], packed["w1"], packed["b1"],
      packed["w2"], packed["b2"], packed["w3"], packed["b3"])

    return out[:n, :NUM_CLASSES]


gaze_encoder_ms_forward_jit = jax.jit(gaze_encoder_ms_forward)


# ---------------------------------- parameter packing ---------------------------------------
def _conv_toeplitz(conv_w, conv_b, ksize):
    """Conv1d(CIN, COUT, ksize, stride=STRIDE) over length T, flattened channel-major on both
    sides, expressed as a dense (CIN*T, COUT*L) matrix + per-column bias."""
    w = np.asarray(jax.device_get(conv_w), np.float32)   # (COUT, CIN, ksize)
    b = np.asarray(jax.device_get(conv_b), np.float32)   # (COUT,)
    L = (T - ksize) // STRIDE + 1
    mat = np.zeros((CIN * T, COUT * L), np.float32)
    for co in range(COUT):
        for ci in range(CIN):
            for l in range(L):
                for k in range(ksize):
                    mat[ci * T + l * STRIDE + k, co * L + l] = w[co, ci, k]
    bias = np.repeat(b, L)                                # col co*L + l -> b[co]
    return mat, bias


def pack_params(params):
    """Fold the three conv encoders into one block-diagonal Toeplitz matrix, pad feature axes
    to multiples of 128, cast matmul operands to bf16 (biases stay f32)."""
    wt = np.zeros((XDIM, FEAT_PAD), np.float32)
    bt = np.zeros((1, FEAT_PAD), np.float32)
    row = col = 0
    for (cw, cb), k in zip(params["conv"], (W1K, W2K, W3K)):
        m, b = _conv_toeplitz(cw, cb, k)
        r, c = m.shape
        wt[row:row + r, col:col + c] = m
        bt[0, col:col + c] = b
        row += r
        col += c

    (l1w, l1b), (l2w, l2b), (l3w, l3b) = params["mlp"]    # stored as (in, out)
    w1 = np.zeros((FEAT_PAD, H1), np.float32)
    w1[:FEAT] = np.asarray(jax.device_get(l1w), np.float32)
    b1 = np.asarray(jax.device_get(l1b), np.float32).reshape(1, H1)

    w2 = np.zeros((H1, H2_PAD), np.float32)
    w2[:, :H2] = np.asarray(jax.device_get(l2w), np.float32)
    b2 = np.zeros((1, H2_PAD), np.float32)
    b2[0, :H2] = np.asarray(jax.device_get(l2b), np.float32).reshape(-1)

    w3 = np.zeros((H2_PAD, OUT_PAD), np.float32)
    w3[:H2, :NUM_CLASSES] = np.asarray(jax.device_get(l3w), np.float32)
    b3 = np.zeros((1, OUT_PAD), np.float32)
    b3[0, :NUM_CLASSES] = np.asarray(jax.device_get(l3b), np.float32).reshape(-1)

    bf = lambda a: jnp.asarray(a, jnp.bfloat16)
    f32 = lambda a: jnp.asarray(a, jnp.float32)
    return {"wt": bf(wt), "bt": f32(bt),
            "w1": bf(w1), "b1": f32(b1),
            "w2": bf(w2), "b2": f32(b2),
            "w3": bf(w3), "b3": f32(b3)}


# ---------------------------------- deterministic init --------------------------------------
def _xavier_normal(key, fan_in, fan_out):
    std = (2.0 / (fan_in + fan_out)) ** 0.5
    return std * jax.random.normal(key, (fan_in, fan_out), jnp.float32)


def init_params(key):
    keys = jax.random.split(key, 6)
    conv = []
    for k, w in zip(keys[:3], (W1K, W2K, W3K)):
        cw = 0.1 * jax.random.normal(k, (COUT, CIN, w), jnp.float32)
        cb = jnp.zeros((COUT,), jnp.float32)
        conv.append((cw, cb))
    mlp = [
        (_xavier_normal(keys[3], FEAT, H1), jnp.zeros((H1,), jnp.float32)),
        (_xavier_normal(keys[4], H1, H2), jnp.zeros((H2,), jnp.float32)),
        (_xavier_normal(keys[5], H2, NUM_CLASSES), jnp.zeros((NUM_CLASSES,), jnp.float32)),
    ]
    return {"conv": conv, "mlp": mlp}


# ---------------------------------- f32 reference (PyTorch semantics) -----------------------
def _reference_forward(params, x1, x2, x3):
    def enc(x, cw, cb, k):
        n = x.shape[0]
        L = (T - k) // STRIDE + 1
        patches = jnp.stack([x[:, :, l * STRIDE:l * STRIDE + k] for l in range(L)], axis=1)
        y = jnp.einsum("nlck,ock->nol", patches, cw) + cb[None, :, None]
        return jnp.maximum(y, 0.0).reshape(n, COUT * L)   # PyTorch channel-major flatten

    f = jnp.concatenate(
        [enc(x, cw, cb, k)
         for (cw, cb), x, k in zip(params["conv"], (x1, x2, x3), (W1K, W2K, W3K))], axis=1)
    (w1, b1), (w2, b2), (w3, b3) = params["mlp"]
    h = jnp.maximum(f @ w1 + b1, 0.0)
    h = jnp.maximum(h @ w2 + b2, 0.0)
    return h @ w3 + b3


# ---------------------------------- demo ----------------------------------------------------
if __name__ == "__main__":
    key = jax.random.PRNGKey(0)
    kp, k1, k2, k3 = jax.random.split(key, 4)
    params = init_params(kp)
    packed = pack_params(params)

    n = 2
    x1 = jax.random.normal(k1, (n, CIN, T), jnp.float32)
    x2 = jax.random.normal(k2, (n, CIN, T), jnp.float32)
    x3 = jax.random.normal(k3, (n, CIN, T), jnp.float32)

    out = gaze_encoder_ms_forward_jit(packed, x1, x2, x3)
    out = jax.block_until_ready(out)
    assert out.shape == (n, NUM_CLASSES), out.shape

    ref = _reference_forward(params, x1, x2, x3)
    err = float(jnp.max(jnp.abs(out - ref)))
    assert err < 1e-1, f"mismatch vs f32 reference: {err}"

    print("KERNEL_OK")
</pallas_src>

<mosaic_0001>
module attributes {stable_mosaic.version = 11 : i64} {
  func.func @_fused_kernel(%arg0: i32, %arg1: memref<8x192xf32, #tpu.memory_space<vmem>>, %arg2: memref<192x384xbf16, #tpu.memory_space<vmem>>, %arg3: memref<1x384xf32, #tpu.memory_space<vmem>>, %arg4: memref<384x512xbf16, #tpu.memory_space<vmem>>, %arg5: memref<1x512xf32, #tpu.memory_space<vmem>>, %arg6: memref<512x128xbf16, #tpu.memory_space<vmem>>, %arg7: memref<1x128xf32, #tpu.memory_space<vmem>>, %arg8: memref<128x128xbf16, #tpu.memory_space<vmem>>, %arg9: memref<1x128xf32, #tpu.memory_space<vmem>>, %arg10: memref<8x128xf32, #tpu.memory_space<vmem>>) attributes {dimension_semantics = [#tpu.dimension_semantics<parallel>], iteration_bounds = array<i64: 1>, scalar_prefetch = 0 : i64, scratch_operands = 0 : i64, tpu.core_type = #tpu.core_type<tc>, window_params = [{transform_indices = @transform_0, window_bounds = array<i64: 8, 192>}, {pipeline_mode = #tpu.pipeline_mode<synchronous>, transform_indices = @transform_1, window_bounds = array<i64: 192, 384>}, {pipeline_mode = #tpu.pipeline_mode<synchronous>, transform_indices = @transform_2, window_bounds = array<i64: 1, 384>}, {pipeline_mode = #tpu.pipeline_mode<synchronous>, transform_indices = @transform_3, window_bounds = array<i64: 384, 512>}, {pipeline_mode = #tpu.pipeline_mode<synchronous>, transform_indices = @transform_4, window_bounds = array<i64: 1, 512>}, {pipeline_mode = #tpu.pipeline_mode<synchronous>, transform_indices = @transform_5, window_bounds = array<i64: 512, 128>}, {pipeline_mode = #tpu.pipeline_mode<synchronous>, transform_indices = @transform_6, window_bounds = array<i64: 1, 128>}, {pipeline_mode = #tpu.pipeline_mode<synchronous>, transform_indices = @transform_7, window_bounds = array<i64: 128, 128>}, {pipeline_mode = #tpu.pipeline_mode<synchronous>, transform_indices = @transform_8, window_bounds = array<i64: 1, 128>}, {transform_indices = @transform_9, window_bounds = array<i64: 8, 128>}]} {
    %c0 = arith.constant 0 : index
    %c0_0 = arith.constant 0 : index
    %0 = vector.load %arg1[%c0, %c0_0] : memref<8x192xf32, #tpu.memory_space<vmem>>, vector<8x192xf32>
    %1 = arith.truncf %0 : vector<8x192xf32> to vector<8x192xbf16>
    %c0_1 = arith.constant 0 : index
    %c0_2 = arith.constant 0 : index
    %2 = vector.load %arg2[%c0_1, %c0_2] : memref<192x384xbf16, #tpu.memory_space<vmem>>, vector<192x384xbf16>
    %cst = arith.constant dense<0.000000e+00> : vector<8x384xf32>
    %3 = tpu.matmul %1, %2, %cst {dimension_numbers = #tpu.dot_dimension_numbers<[1], [0], [0], [1], [0, 0, 1, 1], [], []>} : vector<8x192xbf16>, vector<192x384xbf16>, vector<8x384xf32> -> vector<8x384xf32>
    %c0_3 = arith.constant 0 : index
    %c0_4 = arith.constant 0 : index
    %4 = vector.load %arg3[%c0_3, %c0_4] : memref<1x384xf32, #tpu.memory_space<vmem>>, vector<1x384xf32>
    %5 = vector.broadcast %4 : vector<1x384xf32> to vector<8x384xf32>
    %6 = arith.addf %3, %5 : vector<8x384xf32>
    %cst_5 = arith.constant 0.000000e+00 : f32
    %7 = vector.broadcast %cst_5 : f32 to vector<8x384xf32>
    %8 = arith.maximumf %6, %7 : vector<8x384xf32>
    %9 = arith.truncf %8 : vector<8x384xf32> to vector<8x384xbf16>
    %c0_6 = arith.constant 0 : index
    %c0_7 = arith.constant 0 : index
    %10 = vector.load %arg4[%c0_6, %c0_7] : memref<384x512xbf16, #tpu.memory_space<vmem>>, vector<384x512xbf16>
    %cst_8 = arith.constant dense<0.000000e+00> : vector<8x512xf32>
    %11 = tpu.matmul %9, %10, %cst_8 {dimension_numbers = #tpu.dot_dimension_numbers<[1], [0], [0], [1], [0, 0, 1, 1], [], []>} : vector<8x384xbf16>, vector<384x512xbf16>, vector<8x512xf32> -> vector<8x512xf32>
    %c0_9 = arith.constant 0 : index
    %c0_10 = arith.constant 0 : index
    %12 = vector.load %arg5[%c0_9, %c0_10] : memref<1x512xf32, #tpu.memory_space<vmem>>, vector<1x512xf32>
    %13 = vector.broadcast %12 : vector<1x512xf32> to vector<8x512xf32>
    %14 = arith.addf %11, %13 : vector<8x512xf32>
    %cst_11 = arith.constant 0.000000e+00 : f32
    %15 = vector.broadcast %cst_11 : f32 to vector<8x512xf32>
    %16 = arith.maximumf %14, %15 : vector<8x512xf32>
    %17 = arith.truncf %16 : vector<8x512xf32> to vector<8x512xbf16>
    %c0_12 = arith.constant 0 : index
    %c0_13 = arith.constant 0 : index
    %18 = vector.load %arg6[%c0_12, %c0_13] : memref<512x128xbf16, #tpu.memory_space<vmem>>, vector<512x128xbf16>
    %cst_14 = arith.constant dense<0.000000e+00> : vector<8x128xf32>
    %19 = tpu.matmul %17, %18, %cst_14 {dimension_numbers = #tpu.dot_dimension_numbers<[1], [0], [0], [1], [0, 0, 1, 1], [], []>} : vector<8x512xbf16>, vector<512x128xbf16>, vector<8x128xf32> -> vector<8x128xf32>
    %c0_15 = arith.constant 0 : index
    %c0_16 = arith.constant 0 : index
    %20 = vector.load %arg7[%c0_15, %c0_16] : memref<1x128xf32, #tpu.memory_space<vmem>>, vector<1x128xf32>
    %21 = vector.broadcast %20 : vector<1x128xf32> to vector<8x128xf32>
    %22 = arith.addf %19, %21 : vector<8x128xf32>
    %cst_17 = arith.constant 0.000000e+00 : f32
    %23 = vector.broadcast %cst_17 : f32 to vector<8x128xf32>
    %24 = arith.maximumf %22, %23 : vector<8x128xf32>
    %25 = arith.truncf %24 : vector<8x128xf32> to vector<8x128xbf16>
    %c0_18 = arith.constant 0 : index
    %c0_19 = arith.constant 0 : index
    %26 = vector.load %arg8[%c0_18, %c0_19] : memref<128x128xbf16, #tpu.memory_space<vmem>>, vector<128x128xbf16>
    %cst_20 = arith.constant dense<0.000000e+00> : vector<8x128xf32>
    %27 = tpu.matmul %25, %26, %cst_20 {dimension_numbers = #tpu.dot_dimension_numbers<[1], [0], [0], [1], [0, 0, 1, 1], [], []>} : vector<8x128xbf16>, vector<128x128xbf16>, vector<8x128xf32> -> vector<8x128xf32>
    %c0_21 = arith.constant 0 : index
    %c0_22 = arith.constant 0 : index
    %28 = vector.load %arg9[%c0_21, %c0_22] : memref<1x128xf32, #tpu.memory_space<vmem>>, vector<1x128xf32>
    %29 = vector.broadcast %28 : vector<1x128xf32> to vector<8x128xf32>
    %30 = arith.addf %27, %29 : vector<8x128xf32>
    %c0_23 = arith.constant 0 : index
    %c0_24 = arith.constant 0 : index
    %31 = vector.load %arg10[%c0_23, %c0_24] : memref<8x128xf32, #tpu.memory_space<vmem>>, vector<8x128xf32>
    tpu.vector_store %arg10[%c0_23, %c0_24], %30 {strides = array<i32>} : memref<8x128xf32, #tpu.memory_space<vmem>>, vector<8x128xf32>,
    return
  }
  func.func @transform_0(%arg0: i32) -> (i32, i32) {
    %c0_i32 = arith.constant 0 : i32
    %c0_i32_0 = arith.constant 0 : i32
    return %arg0, %c0_i32 : i32, i32
  }
  func.func @transform_1(%arg0: i32) -> (i32, i32) {
    %c0_i32 = arith.constant 0 : i32
    %c0_i32_0 = arith.constant 0 : i32
    %c0_i32_1 = arith.constant 0 : i32
    return %c0_i32, %c0_i32_0 : i32, i32
  }
  func.func @transform_2(%arg0: i32) -> (i32, i32) {
    %c0_i32 = arith.constant 0 : i32
    %c0_i32_0 = arith.constant 0 : i32
    %c0_i32_1 = arith.constant 0 : i32
    return %c0_i32, %c0_i32_0 : i32, i32
  }
  func.func @transform_3(%arg0: i32) -> (i32, i32) {
    %c0_i32 = arith.constant 0 : i32
    %c0_i32_0 = arith.constant 0 : i32
    %c0_i32_1 = arith.constant 0 : i32
    return %c0_i32, %c0_i32_0 : i32, i32
  }
  func.func @transform_4(%arg0: i32) -> (i32, i32) {
    %c0_i32 = arith.constant 0 : i32
    %c0_i32_0 = arith.constant 0 : i32
    %c0_i32_1 = arith.constant 0 : i32
    return %c0_i32, %c0_i32_0 : i32, i32
  }
  func.func @transform_5(%arg0: i32) -> (i32, i32) {
    %c0_i32 = arith.constant 0 : i32
    %c0_i32_0 = arith.constant 0 : i32
    %c0_i32_1 = arith.constant 0 : i32
    return %c0_i32, %c0_i32_0 : i32, i32
  }
  func.func @transform_6(%arg0: i32) -> (i32, i32) {
    %c0_i32 = arith.constant 0 : i32
    %c0_i32_0 = arith.constant 0 : i32
    %c0_i32_1 = arith.constant 0 : i32
    return %c0_i32, %c0_i32_0 : i32, i32
  }
  func.func @transform_7(%arg0: i32) -> (i32, i32) {
    %c0_i32 = arith.constant 0 : i32
    %c0_i32_0 = arith.constant 0 : i32
    %c0_i32_1 = arith.constant 0 : i32
    return %c0_i32, %c0_i32_0 : i32, i32
  }
  func.func @transform_8(%arg0: i32) -> (i32, i32) {
    %c0_i32 = arith.constant 0 : i32
    %c0_i32_0 = arith.constant 0 : i32
    %c0_i32_1 = arith.constant 0 : i32
    return %c0_i32, %c0_i32_0 : i32, i32
  }
  func.func @transform_9(%arg0: i32) -> (i32, i32) {
    %c0_i32 = arith.constant 0 : i32
    %c0_i32_0 = arith.constant 0 : i32
    return %arg0, %c0_i32 : i32, i32
  }
}

</mosaic_0001>

<llo_original>
// kernel: gaze_encoder_ms_forward.1
$region0: #{gaze_encoder_ms_forward.1}
  #allocation0 [shape = 'u32[]', space=smem, size = 0x4, offset = 0x4, fixed_abs, tag = 'smem constant byte address 0x4 - core index']
  #allocation1 [shape = 'u32[144,128]{1,0:T(1,128)}', space=vmem, size = 0x12000, scoped, tag = 'internal scratch']
  %s0 = inlined_call_operand.vmem [shape: f32[8,192], index: 0, kind: input, shape index: {}]
  %s1 = inlined_call_operand.hbm [shape: bf16[192,384], index: 1, kind: input, shape index: {}]
  %s2 = inlined_call_operand.vmem [shape: f32[1,384], index: 2, kind: input, shape index: {}]
  %s3 = inlined_call_operand.hbm [shape: bf16[384,512], index: 3, kind: input, shape index: {}]
  %s4 = inlined_call_operand.vmem [shape: f32[1,512], index: 4, kind: input, shape index: {}]
  %s5 = inlined_call_operand.hbm [shape: bf16[512,128], index: 5, kind: input, shape index: {}]
  %s6 = inlined_call_operand.vmem [shape: f32[1,128], index: 6, kind: input, shape index: {}]
  %s7 = inlined_call_operand.hbm [shape: bf16[128,128], index: 7, kind: input, shape index: {}]
  %s8 = inlined_call_operand.vmem [shape: f32[1,128], index: 8, kind: input, shape index: {}]
  %s9 = inlined_call_operand.vmem [shape: f32[8,128], index: 9, kind: output, shape index: {}]
  %s10 = sld [smem:[#allocation0]]
  $region62: #{gaze_encoder_ms_forward.1} parent=0
    _
  %s12 = ssub.s32 1, %s10
  %s13 = scalar_select 0, %s12, %s10
  $region1: #{gaze_encoder_ms_forward.1} parent=0
    #allocation2 [shape = 'u8[147456]{0}', space=vmem, size = 0x24000, scoped, tag = 'input window, operand 1, single buffered']
    #allocation3 [shape = 's32[1]{0}', space=sflag, size = 0x4, scoped, tag = 'scoped memory for gaze_encoder_ms_forward.1']
    #allocation4 [shape = 'u8[393216]{0}', space=vmem, size = 0x60000, scoped, tag = 'input window, operand 3, single buffered']
    #allocation5 [shape = 's32[1]{0}', space=sflag, size = 0x4, scoped, tag = 'scoped memory for gaze_encoder_ms_forward.1']
    #allocation6 [shape = 'u8[131072]{0}', space=vmem, size = 0x20000, scoped, tag = 'input window, operand 5, single buffered']
    #allocation7 [shape = 'u8[32768]{0}', space=vmem, size = 0x8000, scoped, tag = 'input window, operand 7, single buffered']
    #allocation8 [shape = 's32[1]{0}', space=sflag, size = 0x4, scoped, tag = 'scoped memory for gaze_encoder_ms_forward.1']
    %14 = vsyncpa [#allocation3], 0
    %15 = vsyncpa [#allocation5], 0
    %16 = vsyncpa [#allocation8], 0
    // Predicated region
    $region2: #{gaze_encoder_ms_forward.1} parent=1 // pred_check
      _
    $region3: #{gaze_encoder_ms_forward.1} parent=1 // pred_check_branch
      %18 = sbr.rel (0) target = $region5
    $region4: #{gaze_encoder_ms_forward.1} parent=1 // pred_region
      _
    $region5: #{gaze_encoder_ms_forward.1} parent=1 // pred_fallthru
      _
    // Predicated region
    $region6: #{gaze_encoder_ms_forward.1} parent=1 // pred_check
      _
    $region7: #{gaze_encoder_ms_forward.1} parent=1 // pred_check_branch
      %20 = sbr.rel (0) target = $region9
    $region8: #{gaze_encoder_ms_forward.1} parent=1 // pred_region
      %s22 = ssub.s32 4608, 4608
      %23 = vsyncadd [#allocation3], %s22
      %s24 = sshll.u32 [#allocation2], 4
      %s25 = int_to_ptr.vmem [resolvable:$true] %s24
      %30 = dma.hbm_to_vmem [thread:$0]  %s1, 4608, %s25, [#allocation3], 192, 192, 12
    $region9: #{gaze_encoder_ms_forward.1} parent=1 // pred_fallthru
      _
    // Predicated region
    $region10: #{gaze_encoder_ms_forward.1} parent=1 // pred_check
      _
    $region11: #{gaze_encoder_ms_forward.1} parent=1 // pred_check_branch
      %32 = sbr.rel (0) target = $region13
    $region12: #{gaze_encoder_ms_forward.1} parent=1 // pred_region
      _
    $region13: #{gaze_encoder_ms_forward.1} parent=1 // pred_fallthru
      _
    // Predicated region
    $region14: #{gaze_encoder_ms_forward.1} parent=1 // pred_check
      _
    $region15: #{gaze_encoder_ms_forward.1} parent=1 // pred_check_branch
      %34 = sbr.rel (0) target = $region17
    $region16: #{gaze_encoder_ms_forward.1} parent=1 // pred_region
      %s36 = ssub.s32 12288, 12288
      %37 = vsyncadd [#allocation5], %s36
      %s38 = sshll.u32 [#allocation4], 4
      %s39 = int_to_ptr.vmem [resolvable:$true] %s38
      %44 = dma.hbm_to_vmem [thread:$0]  %s3, 12288, %s39, [#allocation5], 256, 256, 16
    $region17: #{gaze_encoder_ms_forward.1} parent=1 // pred_fallthru
      _
    // Predicated region
    $region18: #{gaze_encoder_ms_forward.1} parent=1 // pred_check
      _
    $region19: #{gaze_encoder_ms_forward.1} parent=1 // pred_check_branch
      %46 = sbr.rel (0) target = $region21
    $region20: #{gaze_encoder_ms_forward.1} parent=1 // pred_region
      _
    $region21: #{gaze_encoder_ms_forward.1} parent=1 // pred_fallthru
      _
    // Predicated region
    $region22: #{gaze_encoder_ms_forward.1} parent=1 // pred_check
      _
    $region23: #{gaze_encoder_ms_forward.1} parent=1 // pred_check_branch
      %48 = sbr.rel (0) target = $region25
    $region24: #{gaze_encoder_ms_forward.1} parent=1 // pred_region
      %s50 = ssub.s32 4096, 4096
      %51 = vsyncadd [#allocation5], %s50
      %s52 = sshll.u32 [#allocation6], 4
      %s53 = int_to_ptr.vmem [resolvable:$true] %s52
      %58 = dma.hbm_to_vmem [thread:$0]  %s5, 4096, %s53, [#allocation5], 64, 64, 4
    $region25: #{gaze_encoder_ms_forward.1} parent=1 // pred_fallthru
      _
    // Predicated region
    $region26: #{gaze_encoder_ms_forward.1} parent=1 // pred_check
      _
    $region27: #{gaze_encoder_ms_forward.1} parent=1 // pred_check_branch
      %60 = sbr.rel (0) target = $region29
    $region28: #{gaze_encoder_ms_forward.1} parent=1 // pred_region
      _
    $region29: #{gaze_encoder_ms_forward.1} parent=1 // pred_fallthru
      _
    // Predicated region
    $region30: #{gaze_encoder_ms_forward.1} parent=1 // pred_check
      _
    $region31: #{gaze_encoder_ms_forward.1} parent=1 // pred_check_branch
      %62 = sbr.rel (0) target = $region33
    $region32: #{gaze_encoder_ms_forward.1} parent=1 // pred_region
      %s64 = ssub.s32 1024, 1024
      %65 = vsyncadd [#allocation8], %s64
      %s66 = sshll.u32 [#allocation7], 4
      %s67 = int_to_ptr.vmem [resolvable:$true] %s66
      %72 = dma.hbm_to_vmem [thread:$0]  %s7, 1024, %s67, [#allocation8], 64, 64, 4
    $region33: #{gaze_encoder_ms_forward.1} parent=1 // pred_fallthru
      _
    // Predicated region
    $region34: #{gaze_encoder_ms_forward.1} parent=1 // pred_check
      _
    $region35: #{gaze_encoder_ms_forward.1} parent=1 // pred_check_branch
      %74 = sbr.rel (0) target = $region37
    $region36: #{gaze_encoder_ms_forward.1} parent=1 // pred_region
      _
    $region37: #{gaze_encoder_ms_forward.1} parent=1 // pred_fallthru
      _
    // Predicated region
    $region38: #{gaze_encoder_ms_forward.1} parent=1 // pred_check
      _
    $region39: #{gaze_encoder_ms_forward.1} parent=1 // pred_check_branch
      %76 = sbr.rel (0) target = $region41
    $region40: #{gaze_encoder_ms_forward.1} parent=1 // pred_region
      %77 = dma.done [#allocation3], 4608
    $region41: #{gaze_encoder_ms_forward.1} parent=1 // pred_fallthru
      _
    // Predicated region
    $region42: #{gaze_encoder_ms_forward.1} parent=1 // pred_check
      _
    $region43: #{gaze_encoder_ms_forward.1} parent=1 // pred_check_branch
      %79 = sbr.rel (0) target = $region45
    $region44: #{gaze_encoder_ms_forward.1} parent=1 // pred_region
      %80 = dma.done [#allocation5], 12288
    $region45: #{gaze_encoder_ms_forward.1} parent=1 // pred_fallthru
      _
    // Predicated region
    $region46: #{gaze_encoder_ms_forward.1} parent=1 // pred_check
      _
    $region47: #{gaze_encoder_ms_forward.1} parent=1 // pred_check_branch
      %82 = sbr.rel (0) target = $region49
    $region48: #{gaze_encoder_ms_forward.1} parent=1 // pred_region
      %83 = dma.done [#allocation5], 4096
    $region49: #{gaze_encoder_ms_forward.1} parent=1 // pred_fallthru
      _
    // Predicated region
    $region50: #{gaze_encoder_ms_forward.1} parent=1 // pred_check
      _
    $region51: #{gaze_encoder_ms_forward.1} parent=1 // pred_check_branch
      %85 = sbr.rel (0) target = $region53
    $region52: #{gaze_encoder_ms_forward.1} parent=1 // pred_region
      %86 = dma.done [#allocation8], 1024
    $region53: #{gaze_encoder_ms_forward.1} parent=1 // pred_fallthru
      _
    %v88 = vld [vmem:[%s0] sm:$0xff]
    %v89 = vld [vmem:[%s0 + $0x8] sm:$0xff]
    %v90 = vpack.c.bf16 %v88, %v88
    %v91 = vpack.c.bf16 %v89, %v89
    %v92 = vld [vmem:[#allocation2] sm:$0xff]
    %v93 = vld [vmem:[#allocation2 + $0x8] sm:$0xf]
    %v94 = vld [vmem:[#allocation2 + $0xc] sm:$0xff]
    %v95 = vld [vmem:[#allocation2 + $0x14] sm:$0xf]
    %v96 = vld [vmem:[#allocation2 + $0x18] sm:$0xff]
    %v97 = vld [vmem:[#allocation2 + $0x20] sm:$0xf]
    %v98 = vld [vmem:[#allocation2 + $0x24] sm:$0xff]
    %v99 = vld [vmem:[#allocation2 + $0x2c] sm:$0xf]
    %v100 = vld [vmem:[#allocation2 + $0x30] sm:$0xff]
    %v101 = vld [vmem:[#allocation2 + $0x38] sm:$0xf]
    %v102 = vld [vmem:[#allocation2 + $0x3c] sm:$0xff]
    %v103 = vld [vmem:[#allocation2 + $0x44] sm:$0xf]
    %v104 = vld [vmem:[#allocation2 + $0x48] sm:$0xff]
    %v105 = vld [vmem:[#allocation2 + $0x50] sm:$0xf]
    %v106 = vld [vmem:[#allocation2 + $0x54] sm:$0xff]
    %v107 = vld [vmem:[#allocation2 + $0x5c] sm:$0xf]
    %v108 = vld [vmem:[#allocation2 + $0x60] sm:$0xff]
    %v109 = vld [vmem:[#allocation2 + $0x68] sm:$0xf]
    %v110 = vld [vmem:[#allocation2 + $0x6c] sm:$0xff]
    %v111 = vld [vmem:[#allocation2 + $0x74] sm:$0xf]
    %v112 = vld [vmem:[#allocation2 + $0x78] sm:$0xff]
    %v113 = vld [vmem:[#allocation2 + $0x80] sm:$0xf]
    %v114 = vld [vmem:[#allocation2 + $0x84] sm:$0xff]
    %v115 = vld [vmem:[#allocation2 + $0x8c] sm:$0xf]
    %v116 = vld [vmem:[#allocation2 + $0x90] sm:$0xff]
    %v117 = vld [vmem:[#allocation2 + $0x98] sm:$0xf]
    %v118 = vld [vmem:[#allocation2 + $0x9c] sm:$0xff]
    %v119 = vld [vmem:[#allocation2 + $0xa4] sm:$0xf]
    %v120 = vld [vmem:[#allocation2 + $0xa8] sm:$0xff]
    %v121 = vld [vmem:[#allocation2 + $0xb0] sm:$0xf]
    %v122 = vld [vmem:[#allocation2 + $0xb4] sm:$0xff]
    %v123 = vld [vmem:[#allocation2 + $0xbc] sm:$0xf]
    %v124 = vld [vmem:[#allocation2 + $0xc0] sm:$0xff]
    %v125 = vld [vmem:[#allocation2 + $0xc8] sm:$0xf]
    %v126 = vld [vmem:[#allocation2 + $0xcc] sm:$0xff]
    %v127 = vld [vmem:[#allocation2 + $0xd4] sm:$0xf]
    %v128 = vld [vmem:[#allocation2 + $0xd8] sm:$0xff]
    %v129 = vld [vmem:[#allocation2 + $0xe0] sm:$0xf]
    %v130 = vld [vmem:[#allocation2 + $0xe4] sm:$0xff]
    %v131 = vld [vmem:[#allocation2 + $0xec] sm:$0xf]
    %v132 = vld [vmem:[#allocation2 + $0xf0] sm:$0xff]
    %v133 = vld [vmem:[#allocation2 + $0xf8] sm:$0xf]
    %v134 = vld [vmem:[#allocation2 + $0xfc] sm:$0xff]
    %v135 = vld [vmem:[#allocation2 + $0x104] sm:$0xf]
    %v136 = vld [vmem:[#allocation2 + $0x108] sm:$0xff]
    %v137 = vld [vmem:[#allocation2 + $0x110] sm:$0xf]
    %v138 = vld [vmem:[#allocation2 + $0x114] sm:$0xff]
    %v139 = vld [vmem:[#allocation2 + $0x11c] sm:$0xf]
    %v140 = vld [vmem:[%s2] sm:$0x7]
    %v142 = vlaneseq
    %v143 = vshrl.u32 %v142, 7
    %v144 = vsub.s32 0, %v143
    %v145 = vrot.slane %v140, %v144
    %v146 = vlaneseq
    %v147 = vshrl.u32 %v146, 7
    %v148 = vsub.s32 1, %v147
    %v149 = vrot.slane %v140, %v148
    %v150 = vlaneseq
    %v151 = vshrl.u32 %v150, 7
    %v152 = vsub.s32 2, %v151
    %v153 = vrot.slane %v140, %v152
    %v205 = vunpack.c.l.b16 %v92
    %v206 = vunpack.c.h.b16 %v92
    %v207 = vunpack.c.l.b16 %v93
    %v208 = vunpack.c.l.b16 %v94
    %v209 = vunpack.c.h.b16 %v94
    %v210 = vunpack.c.l.b16 %v95
    %v211 = vunpack.c.l.b16 %v96
    %v212 = vunpack.c.h.b16 %v96
    %v213 = vunpack.c.l.b16 %v97
    %v214 = vunpack.c.l.b16 %v98
    %v215 = vunpack.c.h.b16 %v98
    %v216 = vunpack.c.l.b16 %v99
    %v217 = vunpack.c.l.b16 %v100
    %v218 = vunpack.c.h.b16 %v100
    %v219 = vunpack.c.l.b16 %v101
    %v220 = vunpack.c.l.b16 %v102
    %v221 = vunpack.c.h.b16 %v102
    %v222 = vunpack.c.l.b16 %v103
    %v223 = vunpack.c.l.b16 %v104
    %v224 = vunpack.c.h.b16 %v104
    %v225 = vunpack.c.l.b16 %v105
    %v226 = vunpack.c.l.b16 %v106
    %v227 = vunpack.c.h.b16 %v106
    %v228 = vunpack.c.l.b16 %v107
    %v229 = vunpack.c.l.b16 %v108
    %v230 = vunpack.c.h.b16 %v108
    %v231 = vunpack.c.l.b16 %v109
    %v232 = vunpack.c.l.b16 %v110
    %v233 = vunpack.c.h.b16 %v110
    %v234 = vunpack.c.l.b16 %v111
    %v235 = vunpack.c.l.b16 %v112
    %v236 = vunpack.c.h.b16 %v112
    %v237 = vunpack.c.l.b16 %v113
    %v238 = vunpack.c.l.b16 %v114
    %v239 = vunpack.c.h.b16 %v114
    %v240 = vunpack.c.l.b16 %v115
    %v241 = vunpack.c.l.b16 %v116
    %v242 = vunpack.c.h.b16 %v116
    %v243 = vunpack.c.l.b16 %v117
    %v244 = vunpack.c.l.b16 %v118
    %v245 = vunpack.c.h.b16 %v118
    %v246 = vunpack.c.l.b16 %v119
    %v247 = vunpack.c.l.b16 %v120
    %v248 = vunpack.c.h.b16 %v120
    %v249 = vunpack.c.l.b16 %v121
    %v250 = vunpack.c.l.b16 %v122
    %v251 = vunpack.c.h.b16 %v122
    %v252 = vunpack.c.l.b16 %v123
    %v253 = vunpack.c.l.b16 %v124
    %v254 = vunpack.c.h.b16 %v124
    %v255 = vunpack.c.l.b16 %v125
    %v256 = vunpack.c.l.b16 %v126
    %v257 = vunpack.c.h.b16 %v126
    %v258 = vunpack.c.l.b16 %v127
    %v259 = vunpack.c.l.b16 %v128
    %v260 = vunpack.c.h.b16 %v128
    %v261 = vunpack.c.l.b16 %v129
    %v262 = vunpack.c.l.b16 %v130
    %v263 = vunpack.c.h.b16 %v130
    %v264 = vunpack.c.l.b16 %v131
    %v265 = vunpack.c.l.b16 %v132
    %v266 = vunpack.c.h.b16 %v132
    %v267 = vunpack.c.l.b16 %v133
    %v268 = vunpack.c.l.b16 %v134
    %v269 = vunpack.c.h.b16 %v134
    %v270 = vunpack.c.l.b16 %v135
    %v271 = vunpack.c.l.b16 %v136
    %v272 = vunpack.c.h.b16 %v136
    %v273 = vunpack.c.l.b16 %v137
    %v274 = vunpack.c.l.b16 %v138
    %v275 = vunpack.c.h.b16 %v138
    %v276 = vunpack.c.l.b16 %v139
    %v277 = vpack.c.b16 %v208, %v205
    %v278 = vpack.c.b16 %v209, %v206
    %v279 = vpack.c.b16 %v210, %v207
    %v280 = vpack.c.b16 %v214, %v211
    %v281 = vpack.c.b16 %v215, %v212
    %v282 = vpack.c.b16 %v216, %v213
    %v283 = vpack.c.b16 %v220, %v217
    %v284 = vpack.c.b16 %v221, %v218
    %v285 = vpack.c.b16 %v222, %v219
    %v286 = vpack.c.b16 %v226, %v223
    %v287 = vpack.c.b16 %v227, %v224
    %v288 = vpack.c.b16 %v228, %v225
    %v289 = vpack.c.b16 %v232, %v229
    %v290 = vpack.c.b16 %v233, %v230
    %v291 = vpack.c.b16 %v234, %v231
    %v292 = vpack.c.b16 %v238, %v235
    %v293 = vpack.c.b16 %v239, %v236
    %v294 = vpack.c.b16 %v240, %v237
    %v295 = vpack.c.b16 %v244, %v241
    %v296 = vpack.c.b16 %v245, %v242
    %v297 = vpack.c.b16 %v246, %v243
    %v298 = vpack.c.b16 %v250, %v247
    %v299 = vpack.c.b16 %v251, %v248
    %v300 = vpack.c.b16 %v252, %v249
    %v301 = vpack.c.b16 %v256, %v253
    %v302 = vpack.c.b16 %v257, %v254
    %v303 = vpack.c.b16 %v258, %v255
    %v304 = vpack.c.b16 %v262, %v259
    %v305 = vpack.c.b16 %v263, %v260
    %v306 = vpack.c.b16 %v264, %v261
    %v307 = vpack.c.b16 %v268, %v265
    %v308 = vpack.c.b16 %v269, %v266
    %v309 = vpack.c.b16 %v270, %v267
    %v310 = vpack.c.b16 %v274, %v271
    %v311 = vpack.c.b16 %v275, %v272
    %v312 = vpack.c.b16 %v276, %v273
    %vm349 = vcmask 523264
    %v351 = vsel %vm349, %v91, 0
    %353 = vmatprep.subr.bf16.mxu0 %v299
    %354 = vmatpush1.bf16.msra.mxu0 %v298
    %355 = vmatprep.subr.bf16.mxu0 %v296
    %356 = vmatpush1.bf16.msra.mxu0 %v295
    %357 = vmatprep.subr.bf16.mxu0 %v293
    %358 = vmatpush1.bf16.msra.mxu0 %v292
    %359 = vmatprep.subr.bf16.mxu0 %v290
    %360 = vmatpush1.bf16.msra.mxu0 %v289
    %361 = vmatprep.subr.bf16.mxu0 %v287
    %362 = vmatpush1.bf16.msra.mxu0 %v286
    %363 = vmatprep.subr.bf16.mxu0 %v284
    %364 = vmatpush1.bf16.msra.mxu0 %v283
    %365 = vmatprep.subr.bf16.mxu0 %v281
    %366 = vmatpush1.bf16.msra.mxu0 %v280
    %367 = vmatprep.subr.bf16.mxu0 %v278
    %368 = vmatpush1.bf16.msra.mxu0 %v277
    %369 = vmatprep.subr.bf16.mxu0 0
    %370 = vmatpush2.bf16.msra.mxu0 0
    %371 = vmatprep.subr.bf16.mxu0 0
    %372 = vmatpush2.bf16.msra.mxu0 0
    %373 = vmatprep.subr.bf16.mxu0 0
    %374 = vmatpush2.bf16.msra.mxu0 0
    %375 = vmatprep.subr.bf16.mxu0 0
    %376 = vmatpush2.bf16.msra.mxu0 0
    %377 = vmatprep.subr.bf16.mxu0 %v311
    %378 = vmatpush2.bf16.msra.mxu0 %v310
    %379 = vmatprep.subr.bf16.mxu0 %v308
    %380 = vmatpush2.bf16.msra.mxu0 %v307
    %381 = vmatprep.subr.bf16.mxu0 %v305
    %382 = vmatpush2.bf16.msra.mxu0 %v304
    %383 = vmatprep.subr.bf16.mxu0 %v302
    %384 = vmatpush2.bf16.msra.mxu0 %v301
    %385 = vmatprep.mubr.bf16.mxu0 %v351
    %386 = vmatmul.mubr.bf16.gmra.mxu0 %v90
    %v387 = vpop.f32.mrf.mxu0
    %v388 = vadd.f32 %v145, %v387
    %v389 = vpop.f32.mrf.mxu0
    %v390 = vadd.f32 %v149, %v389
    %v391 = vpop.f32.mrf.mxu0
    %v392 = vpop.f32.mrf.mxu0
    %393 = vdwg.mxu0
    %394 = vmatprep.subr.bf16.mxu0 0
    %395 = vmatpush1.bf16.msra.mxu0 %v300
    %396 = vmatprep.subr.bf16.mxu0 0
    %397 = vmatpush1.bf16.msra.mxu0 %v297
    %398 = vmatprep.subr.bf16.mxu0 0
    %399 = vmatpush1.bf16.msra.mxu0 %v294
    %400 = vmatprep.subr.bf16.mxu0 0
    %401 = vmatpush1.bf16.msra.mxu0 %v291
    %402 = vmatprep.subr.bf16.mxu0 0
    %403 = vmatpush1.bf16.msra.mxu0 %v288
    %404 = vmatprep.subr.bf16.mxu0 0
    %405 = vmatpush1.bf16.msra.mxu0 %v285
    %406 = vmatprep.subr.bf16.mxu0 0
    %407 = vmatpush1.bf16.msra.mxu0 %v282
    %408 = vmatprep.subr.bf16.mxu0 0
    %409 = vmatpush1.bf16.msra.mxu0 %v279
    %410 = vmatprep.subr.bf16.mxu0 0
    %411 = vmatpush2.bf16.msra.mxu0 0
    %412 = vmatprep.subr.bf16.mxu0 0
    %413 = vmatpush2.bf16.msra.mxu0 0
    %414 = vmatprep.subr.bf16.mxu0 0
    %415 = vmatpush2.bf16.msra.mxu0 0
    %416 = vmatprep.subr.bf16.mxu0 0
    %417 = vmatpush2.bf16.msra.mxu0 0
    %418 = vmatprep.subr.bf16.mxu0 0
    %419 = vmatpush2.bf16.msra.mxu0 %v312
    %420 = vmatprep.subr.bf16.mxu0 0
    %421 = vmatpush2.bf16.msra.mxu0 %v309
    %422 = vmatprep.subr.bf16.mxu0 0
    %423 = vmatpush2.bf16.msra.mxu0 %v306
    %424 = vmatprep.subr.bf16.mxu0 0
    %425 = vmatpush2.bf16.msra.mxu0 %v303
    %426 = vmatprep.mubr.bf16.mxu0 %v351
    %427 = vmatmul.mubr.bf16.gmra.mxu0 %v90
    %v428 = vpop.f32.mrf.mxu0
    %v429 = vadd.f32 %v153, %v428
    %v430 = vpop.f32.mrf.mxu0
    %v431 = vpop.f32.mrf.mxu0
    %v432 = vpop.f32.mrf.mxu0
    %433 = vdwg.mxu0
    %v434 = vmax.f32 %v388, 0.0
    %v435 = vmax.f32 %v390, 0.0
    %v436 = vmax.f32 %v429, 0.0
    %v437 = vpack.c.bf16 %v434, %v434
    %v438 = vpack.c.bf16 %v435, %v435
    %v439 = vpack.c.bf16 %v436, %v436
    %v440 = vld [vmem:[#allocation4] sm:$0xff]
    %v441 = vld [vmem:[#allocation4 + $0x8] sm:$0xff]
    %v442 = vld [vmem:[#allocation4 + $0x10] sm:$0xff]
    %v443 = vld [vmem:[#allocation4 + $0x18] sm:$0xff]
    %v444 = vld [vmem:[#allocation4 + $0x20] sm:$0xff]
    %v445 = vld [vmem:[#allocation4 + $0x28] sm:$0xff]
    %v446 = vld [vmem:[#allocation4 + $0x30] sm:$0xff]
    %v447 = vld [vmem:[#allocation4 + $0x38] sm:$0xff]
    %v448 = vld [vmem:[#allocation4 + $0x40] sm:$0xff]
    %v449 = vld [vmem:[#allocation4 + $0x48] sm:$0xff]
    %v450 = vld [vmem:[#allocation4 + $0x50] sm:$0xff]
    %v451 = vld [vmem:[#allocation4 + $0x58] sm:$0xff]
    %v452 = vld [vmem:[#allocation4 + $0x60] sm:$0xff]
    %v453 = vld [vmem:[#allocation4 + $0x68] sm:$0xff]
    %v454 = vld [vmem:[#allocation4 + $0x70] sm:$0xff]
    %v455 = vld [vmem:[#allocation4 + $0x78] sm:$0xff]
    %v456 = vld [vmem:[#allocation4 + $0x80] sm:$0xff]
    %v457 = vld [vmem:[#allocation4 + $0x88] sm:$0xff]
    %v458 = vld [vmem:[#allocation4 + $0x90] sm:$0xff]
    %v459 = vld [vmem:[#allocation4 + $0x98] sm:$0xff]
    %v460 = vld [vmem:[#allocation4 + $0xa0] sm:$0xff]
    %v461 = vld [vmem:[#allocation4 + $0xa8] sm:$0xff]
    %v462 = vld [vmem:[#allocation4 + $0xb0] sm:$0xff]
    %v463 = vld [vmem:[#allocation4 + $0xb8] sm:$0xff]
    %v464 = vld [vmem:[#allocation4 + $0xc0] sm:$0xff]
    %v465 = vld [vmem:[#allocation4 + $0xc8] sm:$0xff]
    %v466 = vld [vmem:[#allocation4 + $0xd0] sm:$0xff]
    %v467 = vld [vmem:[#allocation4 + $0xd8] sm:$0xff]
    %v468 = vld [vmem:[#allocation4 + $0xe0] sm:$0xff]
    %v469 = vld [vmem:[#allocation4 + $0xe8] sm:$0xff]
    %v470 = vld [vmem:[#allocation4 + $0xf0] sm:$0xff]
    %v471 = vld [vmem:[#allocation4 + $0xf8] sm:$0xff]
    %v472 = vld [vmem:[#allocation4 + $0x100] sm:$0xff]
    %v473 = vld [vmem:[#allocation4 + $0x108] sm:$0xff]
    %v474 = vld [vmem:[#allocation4 + $0x110] sm:$0xff]
    %v475 = vld [vmem:[#allocation4 + $0x118] sm:$0xff]
    %v476 = vld [vmem:[#allocation4 + $0x120] sm:$0xff]
    %v477 = vld [vmem:[#allocation4 + $0x128] sm:$0xff]
    %v478 = vld [vmem:[#allocation4 + $0x130] sm:$0xff]
    %v479 = vld [vmem:[#allocation4 + $0x138] sm:$0xff]
    %v480 = vld [vmem:[#allocation4 + $0x140] sm:$0xff]
    %v481 = vld [vmem:[#allocation4 + $0x148] sm:$0xff]
    %v482 = vld [vmem:[#allocation4 + $0x150] sm:$0xff]
    %v483 = vld [vmem:[#allocation4 + $0x158] sm:$0xff]
    %v484 = vld [vmem:[#allocation4 + $0x160] sm:$0xff]
    %v485 = vld [vmem:[#allocation4 + $0x168] sm:$0xff]
    %v486 = vld [vmem:[#allocation4 + $0x170] sm:$0xff]
    %v487 = vld [vmem:[#allocation4 + $0x178] sm:$0xff]
    %v488 = vld [vmem:[#allocation4 + $0x180] sm:$0xff]
    %v489 = vld [vmem:[#allocation4 + $0x188] sm:$0xff]
    %v490 = vld [vmem:[#allocation4 + $0x190] sm:$0xff]
    %v491 = vld [vmem:[#allocation4 + $0x198] sm:$0xff]
    %v492 = vld [vmem:[#allocation4 + $0x1a0] sm:$0xff]
    %v493 = vld [vmem:[#allocation4 + $0x1a8] sm:$0xff]
    %v494 = vld [vmem:[#allocation4 + $0x1b0] sm:$0xff]
    %v495 = vld [vmem:[#allocation4 + $0x1b8] sm:$0xff]
    %v496 = vld [vmem:[#allocation4 + $0x1c0] sm:$0xff]
    %v497 = vld [vmem:[#allocation4 + $0x1c8] sm:$0xff]
    %v498 = vld [vmem:[#allocation4 + $0x1d0] sm:$0xff]
    %v499 = vld [vmem:[#allocation4 + $0x1d8] sm:$0xff]
    %v500 = vld [vmem:[#allocation4 + $0x1e0] sm:$0xff]
    %v501 = vld [vmem:[#allocation4 + $0x1e8] sm:$0xff]
    %v502 = vld [vmem:[#allocation4 + $0x1f0] sm:$0xff]
    %v503 = vld [vmem:[#allocation4 + $0x1f8] sm:$0xff]
    %v504 = vld [vmem:[#allocation4 + $0x200] sm:$0xff]
    %v505 = vld [vmem:[#allocation4 + $0x208] sm:$0xff]
    %v506 = vld [vmem:[#allocation4 + $0x210] sm:$0xff]
    %v507 = vld [vmem:[#allocation4 + $0x218] sm:$0xff]
    %v508 = vld [vmem:[#allocation4 + $0x220] sm:$0xff]
    %v509 = vld [vmem:[#allocation4 + $0x228] sm:$0xff]
    %v510 = vld [vmem:[#allocation4 + $0x230] sm:$0xff]
    %v511 = vld [vmem:[#allocation4 + $0x238] sm:$0xff]
    %v512 = vld [vmem:[#allocation4 + $0x240] sm:$0xff]
    %v513 = vld [vmem:[#allocation4 + $0x248] sm:$0xff]
    %v514 = vld [vmem:[#allocation4 + $0x250] sm:$0xff]
    %v515 = vld [vmem:[#allocation4 + $0x258] sm:$0xff]
    %v516 = vld [vmem:[#allocation4 + $0x260] sm:$0xff]
    %v517 = vld [vmem:[#allocation4 + $0x268] sm:$0xff]
    %v518 = vld [vmem:[#allocation4 + $0x270] sm:$0xff]
    %v519 = vld [vmem:[#allocation4 + $0x278] sm:$0xff]
    %v520 = vld [vmem:[#allocation4 + $0x280] sm:$0xff]
    %v521 = vld [vmem:[#allocation4 + $0x288] sm:$0xff]
    %v522 = vld [vmem:[#allocation4 + $0x290] sm:$0xff]
    %v523 = vld [vmem:[#allocation4 + $0x298] sm:$0xff]
    %v524 = vld [vmem:[#allocation4 + $0x2a0] sm:$0xff]
    %v525 = vld [vmem:[#allocation4 + $0x2a8] sm:$0xff]
    %v526 = vld [vmem:[#allocation4 + $0x2b0] sm:$0xff]
    %v527 = vld [vmem:[#allocation4 + $0x2b8] sm:$0xff]
    %v528 = vld [vmem:[#allocation4 + $0x2c0] sm:$0xff]
    %v529 = vld [vmem:[#allocation4 + $0x2c8] sm:$0xff]
    %v530 = vld [vmem:[#allocation4 + $0x2d0] sm:$0xff]
    %v531 = vld [vmem:[#allocation4 + $0x2d8] sm:$0xff]
    %v532 = vld [vmem:[#allocation4 + $0x2e0] sm:$0xff]
    %v533 = vld [vmem:[#allocation4 + $0x2e8] sm:$0xff]
    %v534 = vld [vmem:[#allocation4 + $0x2f0] sm:$0xff]
    %v535 = vld [vmem:[#allocation4 + $0x2f8] sm:$0xff]
    %v536 = vld [vmem:[%s4] sm:$0xf]
    %v538 = vlaneseq
    %v539 = vshrl.u32 %v538, 7
    %v540 = vsub.s32 0, %v539
    %v541 = vrot.slane %v536, %v540
    %v542 = vlaneseq
    %v543 = vshrl.u32 %v542, 7
    %v544 = vsub.s32 1, %v543
    %v545 = vrot.slane %v536, %v544
    %v546 = vlaneseq
    %v547 = vshrl.u32 %v546, 7
    %v548 = vsub.s32 2, %v547
    %v549 = vrot.slane %v536, %v548
    %v550 = vlaneseq
    %v551 = vshrl.u32 %v550, 7
    %v552 = vsub.s32 3, %v551
    %v553 = vrot.slane %v536, %v552
    %v654 = vunpack.c.l.b16 %v440
    %v655 = vunpack.c.h.b16 %v440
    %v656 = vunpack.c.l.b16 %v441
    %v657 = vunpack.c.h.b16 %v441
    %v658 = vunpack.c.l.b16 %v442
    %v659 = vunpack.c.h.b16 %v442
    %v660 = vunpack.c.l.b16 %v443
    %v661 = vunpack.c.h.b16 %v443
    %v662 = vunpack.c.l.b16 %v444
    %v663 = vunpack.c.h.b16 %v444
    %v664 = vunpack.c.l.b16 %v445
    %v665 = vunpack.c.h.b16 %v445
    %v666 = vunpack.c.l.b16 %v446
    %v667 = vunpack.c.h.b16 %v446
    %v668 = vunpack.c.l.b16 %v447
    %v669 = vunpack.c.h.b16 %v447
    %v670 = vunpack.c.l.b16 %v448
    %v671 = vunpack.c.h.b16 %v448
    %v672 = vunpack.c.l.b16 %v449
    %v673 = vunpack.c.h.b16 %v449
    %v674 = vunpack.c.l.b16 %v450
    %v675 = vunpack.c.h.b16 %v450
    %v676 = vunpack.c.l.b16 %v451
    %v677 = vunpack.c.h.b16 %v451
    %v678 = vunpack.c.l.b16 %v452
    %v679 = vunpack.c.h.b16 %v452
    %v680 = vunpack.c.l.b16 %v453
    %v681 = vunpack.c.h.b16 %v453
    %v682 = vunpack.c.l.b16 %v454
    %v683 = vunpack.c.h.b16 %v454
    %v684 = vunpack.c.l.b16 %v455
    %v685 = vunpack.c.h.b16 %v455
    %v686 = vunpack.c.l.b16 %v456
    %v687 = vunpack.c.h.b16 %v456
    %v688 = vunpack.c.l.b16 %v457
    %v689 = vunpack.c.h.b16 %v457
    %v690 = vunpack.c.l.b16 %v458
    %v691 = vunpack.c.h.b16 %v458
    %v692 = vunpack.c.l.b16 %v459
    %v693 = vunpack.c.h.b16 %v459
    %v694 = vunpack.c.l.b16 %v460
    %v695 = vunpack.c.h.b16 %v460
    %v696 = vunpack.c.l.b16 %v461
    %v697 = vunpack.c.h.b16 %v461
    %v698 = vunpack.c.l.b16 %v462
    %v699 = vunpack.c.h.b16 %v462
    %v700 = vunpack.c.l.b16 %v463
    %v701 = vunpack.c.h.b16 %v463
    %v702 = vunpack.c.l.b16 %v464
    %v703 = vunpack.c.h.b16 %v464
    %v704 = vunpack.c.l.b16 %v465
    %v705 = vunpack.c.h.b16 %v465
    %v706 = vunpack.c.l.b16 %v466
    %v707 = vunpack.c.h.b16 %v466
    %v708 = vunpack.c.l.b16 %v467
    %v709 = vunpack.c.h.b16 %v467
    %v710 = vunpack.c.l.b16 %v468
    %v711 = vunpack.c.h.b16 %v468
    %v712 = vunpack.c.l.b16 %v469
    %v713 = vunpack.c.h.b16 %v469
    %v714 = vunpack.c.l.b16 %v470
    %v715 = vunpack.c.h.b16 %v470
    %v716 = vunpack.c.l.b16 %v471
    %v717 = vunpack.c.h.b16 %v471
    %v718 = vunpack.c.l.b16 %v472
    %v719 = vunpack.c.h.b16 %v472
    %v720 = vunpack.c.l.b16 %v473
    %v721 = vunpack.c.h.b16 %v473
    %v722 = vunpack.c.l.b16 %v474
    %v723 = vunpack.c.h.b16 %v474
    %v724 = vunpack.c.l.b16 %v475
    %v725 = vunpack.c.h.b16 %v475
    %v726 = vunpack.c.l.b16 %v476
    %v727 = vunpack.c.h.b16 %v476
    %v728 = vunpack.c.l.b16 %v477
    %v729 = vunpack.c.h.b16 %v477
    %v730 = vunpack.c.l.b16 %v478
    %v731 = vunpack.c.h.b16 %v478
    %v732 = vunpack.c.l.b16 %v479
    %v733 = vunpack.c.h.b16 %v479
    %v734 = vunpack.c.l.b16 %v480
    %v735 = vunpack.c.h.b16 %v480
    %v736 = vunpack.c.l.b16 %v481
    %v737 = vunpack.c.h.b16 %v481
    %v738 = vunpack.c.l.b16 %v482
    %v739 = vunpack.c.h.b16 %v482
    %v740 = vunpack.c.l.b16 %v483
    %v741 = vunpack.c.h.b16 %v483
    %v742 = vunpack.c.l.b16 %v484
    %v743 = vunpack.c.h.b16 %v484
    %v744 = vunpack.c.l.b16 %v485
    %v745 = vunpack.c.h.b16 %v485
    %v746 = vunpack.c.l.b16 %v486
    %v747 = vunpack.c.h.b16 %v486
    %v748 = vunpack.c.l.b16 %v487
    %v749 = vunpack.c.h.b16 %v487
    %v750 = vunpack.c.l.b16 %v488
    %v751 = vunpack.c.h.b16 %v488
    %v752 = vunpack.c.l.b16 %v489
    %v753 = vunpack.c.h.b16 %v489
    %v754 = vunpack.c.l.b16 %v490
    %v755 = vunpack.c.h.b16 %v490
    %v756 = vunpack.c.l.b16 %v491
    %v757 = vunpack.c.h.b16 %v491
    %v758 = vunpack.c.l.b16 %v492
    %v759 = vunpack.c.h.b16 %v492
    %v760 = vunpack.c.l.b16 %v493
    %v761 = vunpack.c.h.b16 %v493
    %v762 = vunpack.c.l.b16 %v494
    %v763 = vunpack.c.h.b16 %v494
    %v764 = vunpack.c.l.b16 %v495
    %v765 = vunpack.c.h.b16 %v495
    %v766 = vunpack.c.l.b16 %v496
    %v767 = vunpack.c.h.b16 %v496
    %v768 = vunpack.c.l.b16 %v497
    %v769 = vunpack.c.h.b16 %v497
    %v770 = vunpack.c.l.b16 %v498
    %v771 = vunpack.c.h.b16 %v498
    %v772 = vunpack.c.l.b16 %v499
    %v773 = vunpack.c.h.b16 %v499
    %v774 = vunpack.c.l.b16 %v500
    %v775 = vunpack.c.h.b16 %v500
    %v776 = vunpack.c.l.b16 %v501
    %v777 = vunpack.c.h.b16 %v501
    %v778 = vunpack.c.l.b16 %v502
    %v779 = vunpack.c.h.b16 %v502
    %v780 = vunpack.c.l.b16 %v503
    %v781 = vunpack.c.h.b16 %v503
    %v782 = vunpack.c.l.b16 %v504
    %v783 = vunpack.c.h.b16 %v504
    %v784 = vunpack.c.l.b16 %v505
    %v785 = vunpack.c.h.b16 %v505
    %v786 = vunpack.c.l.b16 %v506
    %v787 = vunpack.c.h.b16 %v506
    %v788 = vunpack.c.l.b16 %v507
    %v789 = vunpack.c.h.b16 %v507
    %v790 = vunpack.c.l.b16 %v508
    %v791 = vunpack.c.h.b16 %v508
    %v792 = vunpack.c.l.b16 %v509
    %v793 = vunpack.c.h.b16 %v509
    %v794 = vunpack.c.l.b16 %v510
    %v795 = vunpack.c.h.b16 %v510
    %v796 = vunpack.c.l.b16 %v511
    %v797 = vunpack.c.h.b16 %v511
    %v798 = vunpack.c.l.b16 %v512
    %v799 = vunpack.c.h.b16 %v512
    %v800 = vunpack.c.l.b16 %v513
    %v801 = vunpack.c.h.b16 %v513
    %v802 = vunpack.c.l.b16 %v514
    %v803 = vunpack.c.h.b16 %v514
    %v804 = vunpack.c.l.b16 %v515
    %v805 = vunpack.c.h.b16 %v515
    %v806 = vunpack.c.l.b16 %v516
    %v807 = vunpack.c.h.b16 %v516
    %v808 = vunpack.c.l.b16 %v517
    %v809 = vunpack.c.h.b16 %v517
    %v810 = vunpack.c.l.b16 %v518
    %v811 = vunpack.c.h.b16 %v518
    %v812 = vunpack.c.l.b16 %v519
    %v813 = vunpack.c.h.b16 %v519
    %v814 = vunpack.c.l.b16 %v520
    %v815 = vunpack.c.h.b16 %v520
    %v816 = vunpack.c.l.b16 %v521
    %v817 = vunpack.c.h.b16 %v521
    %v818 = vunpack.c.l.b16 %v522
    %v819 = vunpack.c.h.b16 %v522
    %v820 = vunpack.c.l.b16 %v523
    %v821 = vunpack.c.h.b16 %v523
    %v822 = vunpack.c.l.b16 %v524
    %v823 = vunpack.c.h.b16 %v524
    %v824 = vunpack.c.l.b16 %v525
    %v825 = vunpack.c.h.b16 %v525
    %v826 = vunpack.c.l.b16 %v526
    %v827 = vunpack.c.h.b16 %v526
    %v828 = vunpack.c.l.b16 %v527
    %v829 = vunpack.c.h.b16 %v527
    %v830 = vunpack.c.l.b16 %v528
    %v831 = vunpack.c.h.b16 %v528
    %v832 = vunpack.c.l.b16 %v529
    %v833 = vunpack.c.h.b16 %v529
    %v834 = vunpack.c.l.b16 %v530
    %v835 = vunpack.c.h.b16 %v530
    %v836 = vunpack.c.l.b16 %v531
    %v837 = vunpack.c.h.b16 %v531
    %v838 = vunpack.c.l.b16 %v532
    %v839 = vunpack.c.h.b16 %v532
    %v840 = vunpack.c.l.b16 %v533
    %v841 = vunpack.c.h.b16 %v533
    %v842 = vunpack.c.l.b16 %v534
    %v843 = vunpack.c.h.b16 %v534
    %v844 = vunpack.c.l.b16 %v535
    %v845 = vunpack.c.h.b16 %v535
    %v846 = vpack.c.b16 %v658, %v654
    %v847 = vpack.c.b16 %v659, %v655
    %v848 = vpack.c.b16 %v660, %v656
    %v849 = vpack.c.b16 %v661, %v657
    %v850 = vpack.c.b16 %v666, %v662
    %v851 = vpack.c.b16 %v667, %v663
    %v852 = vpack.c.b16 %v668, %v664
    %v853 = vpack.c.b16 %v669, %v665
    %v854 = vpack.c.b16 %v674, %v670
    %v855 = vpack.c.b16 %v675, %v671
    %v856 = vpack.c.b16 %v676, %v672
    %v857 = vpack.c.b16 %v677, %v673
    %v858 = vpack.c.b16 %v682, %v678
    %v859 = vpack.c.b16 %v683, %v679
    %v860 = vpack.c.b16 %v684, %v680
    %v861 = vpack.c.b16 %v685, %v681
    %v862 = vpack.c.b16 %v690, %v686
    %v863 = vpack.c.b16 %v691, %v687
    %v864 = vpack.c.b16 %v692, %v688
    %v865 = vpack.c.b16 %v693, %v689
    %v866 = vpack.c.b16 %v698, %v694
    %v867 = vpack.c.b16 %v699, %v695
    %v868 = vpack.c.b16 %v700, %v696
    %v869 = vpack.c.b16 %v701, %v697
    %v870 = vpack.c.b16 %v706, %v702
    %v871 = vpack.c.b16 %v707, %v703
    %v872 = vpack.c.b16 %v708, %v704
    %v873 = vpack.c.b16 %v709, %v705
    %v874 = vpack.c.b16 %v714, %v710
    %v875 = vpack.c.b16 %v715, %v711
    %v876 = vpack.c.b16 %v716, %v712
    %v877 = vpack.c.b16 %v717, %v713
    %v878 = vpack.c.b16 %v722, %v718
    %v879 = vpack.c.b16 %v723, %v719
    %v880 = vpack.c.b16 %v724, %v720
    %v881 = vpack.c.b16 %v725, %v721
    %v882 = vpack.c.b16 %v730, %v726
    %v883 = vpack.c.b16 %v731, %v727
    %v884 = vpack.c.b16 %v732, %v728
    %v885 = vpack.c.b16 %v733, %v729
    %v886 = vpack.c.b16 %v738, %v734
    %v887 = vpack.c.b16 %v739, %v735
    %v888 = vpack.c.b16 %v740, %v736
    %v889 = vpack.c.b16 %v741, %v737
    %v890 = vpack.c.b16 %v746, %v742
    %v891 = vpack.c.b16 %v747, %v743
    %v892 = vpack.c.b16 %v748, %v744
    %v893 = vpack.c.b16 %v749, %v745
    %v894 = vpack.c.b16 %v754, %v750
    %v895 = vpack.c.b16 %v755, %v751
    %v896 = vpack.c.b16 %v756, %v752
    %v897 = vpack.c.b16 %v757, %v753
    %v898 = vpack.c.b16 %v762, %v758
    %v899 = vpack.c.b16 %v763, %v759
    %v900 = vpack.c.b16 %v764, %v760
    %v901 = vpack.c.b16 %v765, %v761
    %v902 = vpack.c.b16 %v770, %v766
    %v903 = vpack.c.b16 %v771, %v767
    %v904 = vpack.c.b16 %v772, %v768
    %v905 = vpack.c.b16 %v773, %v769
    %v906 = vpack.c.b16 %v778, %v774
    %v907 = vpack.c.b16 %v779, %v775
    %v908 = vpack.c.b16 %v780, %v776
    %v909 = vpack.c.b16 %v781, %v777
    %v910 = vpack.c.b16 %v786, %v782
    %v911 = vpack.c.b16 %v787, %v783
    %v912 = vpack.c.b16 %v788, %v784
    %v913 = vpack.c.b16 %v789, %v785
    %v914 = vpack.c.b16 %v794, %v790
    %v915 = vpack.c.b16 %v795, %v791
    %v916 = vpack.c.b16 %v796, %v792
    %v917 = vpack.c.b16 %v797, %v793
    %v918 = vpack.c.b16 %v802, %v798
    %v919 = vpack.c.b16 %v803, %v799
    %v920 = vpack.c.b16 %v804, %v800
    %v921 = vpack.c.b16 %v805, %v801
    %v922 = vpack.c.b16 %v810, %v806
    %v923 = vpack.c.b16 %v811, %v807
    %v924 = vpack.c.b16 %v812, %v808
    %v925 = vpack.c.b16 %v813, %v809
    %v926 = vpack.c.b16 %v818, %v814
    %v927 = vpack.c.b16 %v819, %v815
    %v928 = vpack.c.b16 %v820, %v816
    %v929 = vpack.c.b16 %v821, %v817
    %v930 = vpack.c.b16 %v826, %v822
    %v931 = vpack.c.b16 %v827, %v823
    %v932 = vpack.c.b16 %v828, %v824
    %v933 = vpack.c.b16 %v829, %v825
    %v934 = vpack.c.b16 %v834, %v830
    %v935 = vpack.c.b16 %v835, %v831
    %v936 = vpack.c.b16 %v836, %v832
    %v937 = vpack.c.b16 %v837, %v833
    %v938 = vpack.c.b16 %v842, %v838
    %v939 = vpack.c.b16 %v843, %v839
    %v940 = vpack.c.b16 %v844, %v840
    %v941 = vpack.c.b16 %v845, %v841
    %1038 = vmatprep.subr.bf16.mxu0 %v875
    %1039 = vmatpush1.bf16.msra.mxu0 %v874
    %1040 = vmatprep.subr.bf16.mxu0 %v871
    %1041 = vmatpush1.bf16.msra.mxu0 %v870
    %1042 = vmatprep.subr.bf16.mxu0 %v867
    %1043 = vmatpush1.bf16.msra.mxu0 %v866
    %1044 = vmatprep.subr.bf16.mxu0 %v863
    %1045 = vmatpush1.bf16.msra.mxu0 %v862
    %1046 = vmatprep.subr.bf16.mxu0 %v859
    %1047 = vmatpush1.bf16.msra.mxu0 %v858
    %1048 = vmatprep.subr.bf16.mxu0 %v855
    %1049 = vmatpush1.bf16.msra.mxu0 %v854
    %1050 = vmatprep.subr.bf16.mxu0 %v851
    %1051 = vmatpush1.bf16.msra.mxu0 %v850
    %1052 = vmatprep.subr.bf16.mxu0 %v847
    %1053 = vmatpush1.bf16.msra.mxu0 %v846
    %1054 = vmatprep.subr.bf16.mxu0 %v907
    %1055 = vmatpush2.bf16.msra.mxu0 %v906
    %1056 = vmatprep.subr.bf16.mxu0 %v903
    %1057 = vmatpush2.bf16.msra.mxu0 %v902
    %1058 = vmatprep.subr.bf16.mxu0 %v899
    %1059 = vmatpush2.bf16.msra.mxu0 %v898
    %1060 = vmatprep.subr.bf16.mxu0 %v895
    %1061 = vmatpush2.bf16.msra.mxu0 %v894
    %1062 = vmatprep.subr.bf16.mxu0 %v891
    %1063 = vmatpush2.bf16.msra.mxu0 %v890
    %1064 = vmatprep.subr.bf16.mxu0 %v887
    %1065 = vmatpush2.bf16.msra.mxu0 %v886
    %1066 = vmatprep.subr.bf16.mxu0 %v883
    %1067 = vmatpush2.bf16.msra.mxu0 %v882
    %1068 = vmatprep.subr.bf16.mxu0 %v879
    %1069 = vmatpush2.bf16.msra.mxu0 %v878
    %1070 = vmatprep.mubr.bf16.mxu0 %v438
    %1071 = vmatmul.mubr.bf16.gmra.mxu0 %v437
    %v1072 = vpop.f32.mrf.mxu0
    %v1073 = vadd.f32 %v541, %v1072
    %v1074 = vpop.f32.mrf.mxu0
    %v1075 = vadd.f32 %v545, %v1074
    %v1076 = vpop.f32.mrf.mxu0
    %v1077 = vpop.f32.mrf.mxu0
    %1078 = vdwg.mxu0
    %1079 = vmatprep.subr.bf16.mxu0 %v939
    %1080 = vmatpush1.bf16.msra.mxu0 %v938
    %1081 = vmatprep.subr.bf16.mxu0 %v935
    %1082 = vmatpush1.bf16.msra.mxu0 %v934
    %1083 = vmatprep.subr.bf16.mxu0 %v931
    %1084 = vmatpush1.bf16.msra.mxu0 %v930
    %1085 = vmatprep.subr.bf16.mxu0 %v927
    %1086 = vmatpush1.bf16.msra.mxu0 %v926
    %1087 = vmatprep.subr.bf16.mxu0 %v923
    %1088 = vmatpush1.bf16.msra.mxu0 %v922
    %1089 = vmatprep.subr.bf16.mxu0 %v919
    %1090 = vmatpush1.bf16.msra.mxu0 %v918
    %1091 = vmatprep.subr.bf16.mxu0 %v915
    %1092 = vmatpush1.bf16.msra.mxu0 %v914
    %1093 = vmatprep.subr.bf16.mxu0 %v911
    %1094 = vmatpush1.bf16.msra.mxu0 %v910
    %1095 = vmatprep.subr.bf16.mxu0 0
    %1096 = vmatpush2.bf16.msra.mxu0 0
    %1097 = vmatprep.subr.bf16.mxu0 0
    %1098 = vmatpush2.bf16.msra.mxu0 0
    %1099 = vmatprep.subr.bf16.mxu0 0
    %1100 = vmatpush2.bf16.msra.mxu0 0
    %1101 = vmatprep.subr.bf16.mxu0 0
    %1102 = vmatpush2.bf16.msra.mxu0 0
    %1103 = vmatprep.subr.bf16.mxu0 0
    %1104 = vmatpush2.bf16.msra.mxu0 0
    %1105 = vmatprep.subr.bf16.mxu0 0
    %1106 = vmatpush2.bf16.msra.mxu0 0
    %1107 = vmatprep.subr.bf16.mxu0 0
    %1108 = vmatpush2.bf16.msra.mxu0 0
    %1109 = vmatprep.subr.bf16.mxu0 0
    %1110 = vmatpush2.bf16.msra.mxu0 0
    %1111 = vmatprep.mubr.bf16.mxu0 0
    %1112 = vmatmul.mubr.bf16.gmra.mxu0 %v439
    %v1113 = vpop.f32.mrf.mxu0
    %v1114 = vadd.f32 %v1073, %v1113
    %v1115 = vpop.f32.mrf.mxu0
    %v1116 = vadd.f32 %v1075, %v1115
    %v1117 = vpop.f32.mrf.mxu0
    %v1118 = vpop.f32.mrf.mxu0
    %1119 = vdwg.mxu0
    %1120 = vmatprep.subr.bf16.mxu0 %v877
    %1121 = vmatpush1.bf16.msra.mxu0 %v876
    %1122 = vmatprep.subr.bf16.mxu0 %v873
    %1123 = vmatpush1.bf16.msra.mxu0 %v872
    %1124 = vmatprep.subr.bf16.mxu0 %v869
    %1125 = vmatpush1.bf16.msra.mxu0 %v868
    %1126 = vmatprep.subr.bf16.mxu0 %v865
    %1127 = vmatpush1.bf16.msra.mxu0 %v864
    %1128 = vmatprep.subr.bf16.mxu0 %v861
    %1129 = vmatpush1.bf16.msra.mxu0 %v860
    %1130 = vmatprep.subr.bf16.mxu0 %v857
    %1131 = vmatpush1.bf16.msra.mxu0 %v856
    %1132 = vmatprep.subr.bf16.mxu0 %v853
    %1133 = vmatpush1.bf16.msra.mxu0 %v852
    %1134 = vmatprep.subr.bf16.mxu0 %v849
    %1135 = vmatpush1.bf16.msra.mxu0 %v848
    %1136 = vmatprep.subr.bf16.mxu0 %v909
    %1137 = vmatpush2.bf16.msra.mxu0 %v908
    %1138 = vmatprep.subr.bf16.mxu0 %v905
    %1139 = vmatpush2.bf16.msra.mxu0 %v904
    %1140 = vmatprep.subr.bf16.mxu0 %v901
    %1141 = vmatpush2.bf16.msra.mxu0 %v900
    %1142 = vmatprep.subr.bf16.mxu0 %v897
    %1143 = vmatpush2.bf16.msra.mxu0 %v896
    %1144 = vmatprep.subr.bf16.mxu0 %v893
    %1145 = vmatpush2.bf16.msra.mxu0 %v892
    %1146 = vmatprep.subr.bf16.mxu0 %v889
    %1147 = vmatpush2.bf16.msra.mxu0 %v888
    %1148 = vmatprep.subr.bf16.mxu0 %v885
    %1149 = vmatpush2.bf16.msra.mxu0 %v884
    %1150 = vmatprep.subr.bf16.mxu0 %v881
    %1151 = vmatpush2.bf16.msra.mxu0 %v880
    %1152 = vmatprep.mubr.bf16.mxu0 %v438
    %1153 = vmatmul.mubr.bf16.gmra.mxu0 %v437
    %v1154 = vpop.f32.mrf.mxu0
    %v1155 = vadd.f32 %v549, %v1154
    %v1156 = vpop.f32.mrf.mxu0
    %v1157 = vadd.f32 %v553, %v1156
    %v1158 = vpop.f32.mrf.mxu0
    %v1159 = vpop.f32.mrf.mxu0
    %1160 = vdwg.mxu0
    %1161 = vmatprep.subr.bf16.mxu0 %v941
    %1162 = vmatpush1.bf16.msra.mxu0 %v940
    %1163 = vmatprep.subr.bf16.mxu0 %v937
    %1164 = vmatpush1.bf16.msra.mxu0 %v936
    %1165 = vmatprep.subr.bf16.mxu0 %v933
    %1166 = vmatpush1.bf16.msra.mxu0 %v932
    %1167 = vmatprep.subr.bf16.mxu0 %v929
    %1168 = vmatpush1.bf16.msra.mxu0 %v928
    %1169 = vmatprep.subr.bf16.mxu0 %v925
    %1170 = vmatpush1.bf16.msra.mxu0 %v924
    %1171 = vmatprep.subr.bf16.mxu0 %v921
    %1172 = vmatpush1.bf16.msra.mxu0 %v920
    %1173 = vmatprep.subr.bf16.mxu0 %v917
    %1174 = vmatpush1.bf16.msra.mxu0 %v916
    %1175 = vmatprep.subr.bf16.mxu0 %v913
    %1176 = vmatpush1.bf16.msra.mxu0 %v912
    %1177 = vmatprep.subr.bf16.mxu0 0
    %1178 = vmatpush2.bf16.msra.mxu0 0
    %1179 = vmatprep.subr.bf16.mxu0 0
    %1180 = vmatpush2.bf16.msra.mxu0 0
    %1181 = vmatprep.subr.bf16.mxu0 0
    %1182 = vmatpush2.bf16.msra.mxu0 0
    %1183 = vmatprep.subr.bf16.mxu0 0
    %1184 = vmatpush2.bf16.msra.mxu0 0
    %1185 = vmatprep.subr.bf16.mxu0 0
    %1186 = vmatpush2.bf16.msra.mxu0 0
    %1187 = vmatprep.subr.bf16.mxu0 0
    %1188 = vmatpush2.bf16.msra.mxu0 0
    %1189 = vmatprep.subr.bf16.mxu0 0
    %1190 = vmatpush2.bf16.msra.mxu0 0
    %1191 = vmatprep.subr.bf16.mxu0 0
    %1192 = vmatpush2.bf16.msra.mxu0 0
    %1193 = vmatprep.mubr.bf16.mxu0 0
    %1194 = vmatmul.mubr.bf16.gmra.mxu0 %v439
    %v1195 = vpop.f32.mrf.mxu0
    %v1196 = vadd.f32 %v1155, %v1195
    %v1197 = vpop.f32.mrf.mxu0
    %v1198 = vadd.f32 %v1157, %v1197
    %v1199 = vpop.f32.mrf.mxu0
    %v1200 = vpop.f32.mrf.mxu0
    %1201 = vdwg.mxu0
    %v1202 = vmax.f32 %v1114, 0.0
    %v1203 = vmax.f32 %v1116, 0.0
    %v1204 = vmax.f32 %v1196, 0.0
    %v1205 = vmax.f32 %v1198, 0.0
    %v1206 = vpack.c.bf16 %v1202, %v1202
    %v1207 = vpack.c.bf16 %v1203, %v1203
    %v1208 = vpack.c.bf16 %v1204, %v1204
    %v1209 = vpack.c.bf16 %v1205, %v1205
    %v1210 = vld [vmem:[#allocation6] sm:$0xf]
    %v1211 = vld [vmem:[#allocation6 + $0x4] sm:$0xf]
    %v1212 = vld [vmem:[#allocation6 + $0x8] sm:$0xf]
    %v1213 = vld [vmem:[#allocation6 + $0xc] sm:$0xf]
    %v1214 = vld [vmem:[#allocation6 + $0x10] sm:$0xf]
    %v1215 = vld [vmem:[#allocation6 + $0x14] sm:$0xf]
    %v1216 = vld [vmem:[#allocation6 + $0x18] sm:$0xf]
    %v1217 = vld [vmem:[#allocation6 + $0x1c] sm:$0xf]
    %v1218 = vld [vmem:[#allocation6 + $0x20] sm:$0xf]
    %v1219 = vld [vmem:[#allocation6 + $0x24] sm:$0xf]
    %v1220 = vld [vmem:[#allocation6 + $0x28] sm:$0xf]
    %v1221 = vld [vmem:[#allocation6 + $0x2c] sm:$0xf]
    %v1222 = vld [vmem:[#allocation6 + $0x30] sm:$0xf]
    %v1223 = vld [vmem:[#allocation6 + $0x34] sm:$0xf]
    %v1224 = vld [vmem:[#allocation6 + $0x38] sm:$0xf]
    %v1225 = vld [vmem:[#allocation6 + $0x3c] sm:$0xf]
    %v1226 = vld [vmem:[#allocation6 + $0x40] sm:$0xf]
    %v1227 = vld [vmem:[#allocation6 + $0x44] sm:$0xf]
    %v1228 = vld [vmem:[#allocation6 + $0x48] sm:$0xf]
    %v1229 = vld [vmem:[#allocation6 + $0x4c] sm:$0xf]
    %v1230 = vld [vmem:[#allocation6 + $0x50] sm:$0xf]
    %v1231 = vld [vmem:[#allocation6 + $0x54] sm:$0xf]
    %v1232 = vld [vmem:[#allocation6 + $0x58] sm:$0xf]
    %v1233 = vld [vmem:[#allocation6 + $0x5c] sm:$0xf]
    %v1234 = vld [vmem:[#allocation6 + $0x60] sm:$0xf]
    %v1235 = vld [vmem:[#allocation6 + $0x64] sm:$0xf]
    %v1236 = vld [vmem:[#allocation6 + $0x68] sm:$0xf]
    %v1237 = vld [vmem:[#allocation6 + $0x6c] sm:$0xf]
    %v1238 = vld [vmem:[#allocation6 + $0x70] sm:$0xf]
    %v1239 = vld [vmem:[#allocation6 + $0x74] sm:$0xf]
    %v1240 = vld [vmem:[#allocation6 + $0x78] sm:$0xf]
    %v1241 = vld [vmem:[#allocation6 + $0x7c] sm:$0xf]
    %v1242 = vld [vmem:[#allocation6 + $0x80] sm:$0xf]
    %v1243 = vld [vmem:[#allocation6 + $0x84] sm:$0xf]
    %v1244 = vld [vmem:[#allocation6 + $0x88] sm:$0xf]
    %v1245 = vld [vmem:[#allocation6 + $0x8c] sm:$0xf]
    %v1246 = vld [vmem:[#allocation6 + $0x90] sm:$0xf]
    %v1247 = vld [vmem:[#allocation6 + $0x94] sm:$0xf]
    %v1248 = vld [vmem:[#allocation6 + $0x98] sm:$0xf]
    %v1249 = vld [vmem:[#allocation6 + $0x9c] sm:$0xf]
    %v1250 = vld [vmem:[#allocation6 + $0xa0] sm:$0xf]
    %v1251 = vld [vmem:[#allocation6 + $0xa4] sm:$0xf]
    %v1252 = vld [vmem:[#allocation6 + $0xa8] sm:$0xf]
    %v1253 = vld [vmem:[#allocation6 + $0xac] sm:$0xf]
    %v1254 = vld [vmem:[#allocation6 + $0xb0] sm:$0xf]
    %v1255 = vld [vmem:[#allocation6 + $0xb4] sm:$0xf]
    %v1256 = vld [vmem:[#allocation6 + $0xb8] sm:$0xf]
    %v1257 = vld [vmem:[#allocation6 + $0xbc] sm:$0xf]
    %v1258 = vld [vmem:[#allocation6 + $0xc0] sm:$0xf]
    %v1259 = vld [vmem:[#allocation6 + $0xc4] sm:$0xf]
    %v1260 = vld [vmem:[#allocation6 + $0xc8] sm:$0xf]
    %v1261 = vld [vmem:[#allocation6 + $0xcc] sm:$0xf]
    %v1262 = vld [vmem:[#allocation6 + $0xd0] sm:$0xf]
    %v1263 = vld [vmem:[#allocation6 + $0xd4] sm:$0xf]
    %v1264 = vld [vmem:[#allocation6 + $0xd8] sm:$0xf]
    %v1265 = vld [vmem:[#allocation6 + $0xdc] sm:$0xf]
    %v1266 = vld [vmem:[#allocation6 + $0xe0] sm:$0xf]
    %v1267 = vld [vmem:[#allocation6 + $0xe4] sm:$0xf]
    %v1268 = vld [vmem:[#allocation6 + $0xe8] sm:$0xf]
    %v1269 = vld [vmem:[#allocation6 + $0xec] sm:$0xf]
    %v1270 = vld [vmem:[#allocation6 + $0xf0] sm:$0xf]
    %v1271 = vld [vmem:[#allocation6 + $0xf4] sm:$0xf]
    %v1272 = vld [vmem:[#allocation6 + $0xf8] sm:$0xf]
    %v1273 = vld [vmem:[#allocation6 + $0xfc] sm:$0xf]
    %v1274 = vld [vmem:[%s6] sm:$0x1]
    %v1276 = vlaneseq
    %v1277 = vshrl.u32 %v1276, 7
    %v1278 = vsub.s32 0, %v1277
    %v1279 = vrot.slane %v1274, %v1278
    %v1345 = vunpack.c.l.b16 %v1210
    %v1346 = vunpack.c.l.b16 %v1211
    %v1347 = vunpack.c.l.b16 %v1212
    %v1348 = vunpack.c.l.b16 %v1213
    %v1349 = vunpack.c.l.b16 %v1214
    %v1350 = vunpack.c.l.b16 %v1215
    %v1351 = vunpack.c.l.b16 %v1216
    %v1352 = vunpack.c.l.b16 %v1217
    %v1353 = vunpack.c.l.b16 %v1218
    %v1354 = vunpack.c.l.b16 %v1219
    %v1355 = vunpack.c.l.b16 %v1220
    %v1356 = vunpack.c.l.b16 %v1221
    %v1357 = vunpack.c.l.b16 %v1222
    %v1358 = vunpack.c.l.b16 %v1223
    %v1359 = vunpack.c.l.b16 %v1224
    %v1360 = vunpack.c.l.b16 %v1225
    %v1361 = vunpack.c.l.b16 %v1226
    %v1362 = vunpack.c.l.b16 %v1227
    %v1363 = vunpack.c.l.b16 %v1228
    %v1364 = vunpack.c.l.b16 %v1229
    %v1365 = vunpack.c.l.b16 %v1230
    %v1366 = vunpack.c.l.b16 %v1231
    %v1367 = vunpack.c.l.b16 %v1232
    %v1368 = vunpack.c.l.b16 %v1233
    %v1369 = vunpack.c.l.b16 %v1234
    %v1370 = vunpack.c.l.b16 %v1235
    %v1371 = vunpack.c.l.b16 %v1236
    %v1372 = vunpack.c.l.b16 %v1237
    %v1373 = vunpack.c.l.b16 %v1238
    %v1374 = vunpack.c.l.b16 %v1239
    %v1375 = vunpack.c.l.b16 %v1240
    %v1376 = vunpack.c.l.b16 %v1241
    %v1377 = vunpack.c.l.b16 %v1242
    %v1378 = vunpack.c.l.b16 %v1243
    %v1379 = vunpack.c.l.b16 %v1244
    %v1380 = vunpack.c.l.b16 %v1245
    %v1381 = vunpack.c.l.b16 %v1246
    %v1382 = vunpack.c.l.b16 %v1247
    %v1383 = vunpack.c.l.b16 %v1248
    %v1384 = vunpack.c.l.b16 %v1249
    %v1385 = vunpack.c.l.b16 %v1250
    %v1386 = vunpack.c.l.b16 %v1251
    %v1387 = vunpack.c.l.b16 %v1252
    %v1388 = vunpack.c.l.b16 %v1253
    %v1389 = vunpack.c.l.b16 %v1254
    %v1390 = vunpack.c.l.b16 %v1255
    %v1391 = vunpack.c.l.b16 %v1256
    %v1392 = vunpack.c.l.b16 %v1257
    %v1393 = vunpack.c.l.b16 %v1258
    %v1394 = vunpack.c.l.b16 %v1259
    %v1395 = vunpack.c.l.b16 %v1260
    %v1396 = vunpack.c.l.b16 %v1261
    %v1397 = vunpack.c.l.b16 %v1262
    %v1398 = vunpack.c.l.b16 %v1263
    %v1399 = vunpack.c.l.b16 %v1264
    %v1400 = vunpack.c.l.b16 %v1265
    %v1401 = vunpack.c.l.b16 %v1266
    %v1402 = vunpack.c.l.b16 %v1267
    %v1403 = vunpack.c.l.b16 %v1268
    %v1404 = vunpack.c.l.b16 %v1269
    %v1405 = vunpack.c.l.b16 %v1270
    %v1406 = vunpack.c.l.b16 %v1271
    %v1407 = vunpack.c.l.b16 %v1272
    %v1408 = vunpack.c.l.b16 %v1273
    %v1409 = vpack.c.b16 %v1346, %v1345
    %v1410 = vpack.c.b16 %v1348, %v1347
    %v1411 = vpack.c.b16 %v1350, %v1349
    %v1412 = vpack.c.b16 %v1352, %v1351
    %v1413 = vpack.c.b16 %v1354, %v1353
    %v1414 = vpack.c.b16 %v1356, %v1355
    %v1415 = vpack.c.b16 %v1358, %v1357
    %v1416 = vpack.c.b16 %v1360, %v1359
    %v1417 = vpack.c.b16 %v1362, %v1361
    %v1418 = vpack.c.b16 %v1364, %v1363
    %v1419 = vpack.c.b16 %v1366, %v1365
    %v1420 = vpack.c.b16 %v1368, %v1367
    %v1421 = vpack.c.b16 %v1370, %v1369
    %v1422 = vpack.c.b16 %v1372, %v1371
    %v1423 = vpack.c.b16 %v1374, %v1373
    %v1424 = vpack.c.b16 %v1376, %v1375
    %v1425 = vpack.c.b16 %v1378, %v1377
    %v1426 = vpack.c.b16 %v1380, %v1379
    %v1427 = vpack.c.b16 %v1382, %v1381
    %v1428 = vpack.c.b16 %v1384, %v1383
    %v1429 = vpack.c.b16 %v1386, %v1385
    %v1430 = vpack.c.b16 %v1388, %v1387
    %v1431 = vpack.c.b16 %v1390, %v1389
    %v1432 = vpack.c.b16 %v1392, %v1391
    %v1433 = vpack.c.b16 %v1394, %v1393
    %v1434 = vpack.c.b16 %v1396, %v1395
    %v1435 = vpack.c.b16 %v1398, %v1397
    %v1436 = vpack.c.b16 %v1400, %v1399
    %v1437 = vpack.c.b16 %v1402, %v1401
    %v1438 = vpack.c.b16 %v1404, %v1403
    %v1439 = vpack.c.b16 %v1406, %v1405
    %v1440 = vpack.c.b16 %v1408, %v1407
    %1473 = vmatprep.subr.bf16.mxu0 0
    %1474 = vmatpush1.bf16.msra.mxu0 %v1416
    %1475 = vmatprep.subr.bf16.mxu0 0
    %1476 = vmatpush1.bf16.msra.mxu0 %v1415
    %1477 = vmatprep.subr.bf16.mxu0 0
    %1478 = vmatpush1.bf16.msra.mxu0 %v1414
    %1479 = vmatprep.subr.bf16.mxu0 0
    %1480 = vmatpush1.bf16.msra.mxu0 %v1413
    %1481 = vmatprep.subr.bf16.mxu0 0
    %1482 = vmatpush1.bf16.msra.mxu0 %v1412
    %1483 = vmatprep.subr.bf16.mxu0 0
    %1484 = vmatpush1.bf16.msra.mxu0 %v1411
    %1485 = vmatprep.subr.bf16.mxu0 0
    %1486 = vmatpush1.bf16.msra.mxu0 %v1410
    %1487 = vmatprep.subr.bf16.mxu0 0
    %1488 = vmatpush1.bf16.msra.mxu0 %v1409
    %1489 = vmatprep.subr.bf16.mxu0 0
    %1490 = vmatpush2.bf16.msra.mxu0 %v1424
    %1491 = vmatprep.subr.bf16.mxu0 0
    %1492 = vmatpush2.bf16.msra.mxu0 %v1423
    %1493 = vmatprep.subr.bf16.mxu0 0
    %1494 = vmatpush2.bf16.msra.mxu0 %v1422
    %1495 = vmatprep.subr.bf16.mxu0 0
    %1496 = vmatpush2.bf16.msra.mxu0 %v1421
    %1497 = vmatprep.subr.bf16.mxu0 0
    %1498 = vmatpush2.bf16.msra.mxu0 %v1420
    %1499 = vmatprep.subr.bf16.mxu0 0
    %1500 = vmatpush2.bf16.msra.mxu0 %v1419
    %1501 = vmatprep.subr.bf16.mxu0 0
    %1502 = vmatpush2.bf16.msra.mxu0 %v1418
    %1503 = vmatprep.subr.bf16.mxu0 0
    %1504 = vmatpush2.bf16.msra.mxu0 %v1417
    %1505 = vmatprep.mubr.bf16.mxu0 %v1207
    %1506 = vmatmul.mubr.bf16.gmra.mxu0 %v1206
    %v1507 = vpop.f32.mrf.mxu0
    %v1508 = vadd.f32 %v1279, %v1507
    %v1509 = vpop.f32.mrf.mxu0
    %v1510 = vpop.f32.mrf.mxu0
    %v1511 = vpop.f32.mrf.mxu0
    %1512 = vdwg.mxu0
    %1513 = vmatprep.subr.bf16.mxu0 0
    %1514 = vmatpush1.bf16.msra.mxu0 %v1432
    %1515 = vmatprep.subr.bf16.mxu0 0
    %1516 = vmatpush1.bf16.msra.mxu0 %v1431
    %1517 = vmatprep.subr.bf16.mxu0 0
    %1518 = vmatpush1.bf16.msra.mxu0 %v1430
    %1519 = vmatprep.subr.bf16.mxu0 0
    %1520 = vmatpush1.bf16.msra.mxu0 %v1429
    %1521 = vmatprep.subr.bf16.mxu0 0
    %1522 = vmatpush1.bf16.msra.mxu0 %v1428
    %1523 = vmatprep.subr.bf16.mxu0 0
    %1524 = vmatpush1.bf16.msra.mxu0 %v1427
    %1525 = vmatprep.subr.bf16.mxu0 0
    %1526 = vmatpush1.bf16.msra.mxu0 %v1426
    %1527 = vmatprep.subr.bf16.mxu0 0
    %1528 = vmatpush1.bf16.msra.mxu0 %v1425
    %1529 = vmatprep.subr.bf16.mxu0 0
    %1530 = vmatpush2.bf16.msra.mxu0 %v1440
    %1531 = vmatprep.subr.bf16.mxu0 0
    %1532 = vmatpush2.bf16.msra.mxu0 %v1439
    %1533 = vmatprep.subr.bf16.mxu0 0
    %1534 = vmatpush2.bf16.msra.mxu0 %v1438
    %1535 = vmatprep.subr.bf16.mxu0 0
    %1536 = vmatpush2.bf16.msra.mxu0 %v1437
    %1537 = vmatprep.subr.bf16.mxu0 0
    %1538 = vmatpush2.bf16.msra.mxu0 %v1436
    %1539 = vmatprep.subr.bf16.mxu0 0
    %1540 = vmatpush2.bf16.msra.mxu0 %v1435
    %1541 = vmatprep.subr.bf16.mxu0 0
    %1542 = vmatpush2.bf16.msra.mxu0 %v1434
    %1543 = vmatprep.subr.bf16.mxu0 0
    %1544 = vmatpush2.bf16.msra.mxu0 %v1433
    %1545 = vmatprep.mubr.bf16.mxu0 %v1209
    %1546 = vmatmul.mubr.bf16.gmra.mxu0 %v1208
    %v1547 = vpop.f32.mrf.mxu0
    %v1548 = vadd.f32 %v1508, %v1547
    %v1549 = vpop.f32.mrf.mxu0
    %v1550 = vpop.f32.mrf.mxu0
    %v1551 = vpop.f32.mrf.mxu0
    %1552 = vdwg.mxu0
    %v1553 = vmax.f32 %v1548, 0.0
    %v1554 = vpack.c.bf16 %v1553, %v1553
    %v1555 = vld [vmem:[#allocation7] sm:$0xf]
    %v1556 = vld [vmem:[#allocation7 + $0x4] sm:$0xf]
    %v1557 = vld [vmem:[#allocation7 + $0x8] sm:$0xf]
    %v1558 = vld [vmem:[#allocation7 + $0xc] sm:$0xf]
    %v1559 = vld [vmem:[#allocation7 + $0x10] sm:$0xf]
    %v1560 = vld [vmem:[#allocation7 + $0x14] sm:$0xf]
    %v1561 = vld [vmem:[#allocation7 + $0x18] sm:$0xf]
    %v1562 = vld [vmem:[#allocation7 + $0x1c] sm:$0xf]
    %v1563 = vld [vmem:[#allocation7 + $0x20] sm:$0xf]
    %v1564 = vld [vmem:[#allocation7 + $0x24] sm:$0xf]
    %v1565 = vld [vmem:[#allocation7 + $0x28] sm:$0xf]
    %v1566 = vld [vmem:[#allocation7 + $0x2c] sm:$0xf]
    %v1567 = vld [vmem:[#allocation7 + $0x30] sm:$0xf]
    %v1568 = vld [vmem:[#allocation7 + $0x34] sm:$0xf]
    %v1569 = vld [vmem:[#allocation7 + $0x38] sm:$0xf]
    %v1570 = vld [vmem:[#allocation7 + $0x3c] sm:$0xf]
    %v1571 = vld [vmem:[%s8] sm:$0x1]
    %v1573 = vlaneseq
    %v1574 = vshrl.u32 %v1573, 7
    %v1575 = vsub.s32 0, %v1574
    %v1576 = vrot.slane %v1571, %v1575
    %v1594 = vunpack.c.l.b16 %v1555
    %v1595 = vunpack.c.l.b16 %v1556
    %v1596 = vunpack.c.l.b16 %v1557
    %v1597 = vunpack.c.l.b16 %v1558
    %v1598 = vunpack.c.l.b16 %v1559
    %v1599 = vunpack.c.l.b16 %v1560
    %v1600 = vunpack.c.l.b16 %v1561
    %v1601 = vunpack.c.l.b16 %v1562
    %v1602 = vunpack.c.l.b16 %v1563
    %v1603 = vunpack.c.l.b16 %v1564
    %v1604 = vunpack.c.l.b16 %v1565
    %v1605 = vunpack.c.l.b16 %v1566
    %v1606 = vunpack.c.l.b16 %v1567
    %v1607 = vunpack.c.l.b16 %v1568
    %v1608 = vunpack.c.l.b16 %v1569
    %v1609 = vunpack.c.l.b16 %v1570
    %v1610 = vpack.c.b16 %v1595, %v1594
    %v1611 = vpack.c.b16 %v1597, %v1596
    %v1612 = vpack.c.b16 %v1599, %v1598
    %v1613 = vpack.c.b16 %v1601, %v1600
    %v1614 = vpack.c.b16 %v1603, %v1602
    %v1615 = vpack.c.b16 %v1605, %v1604
    %v1616 = vpack.c.b16 %v1607, %v1606
    %v1617 = vpack.c.b16 %v1609, %v1608
    %1626 = vmatprep.subr.bf16.mxu0 0
    %1627 = vmatpush1.bf16.msra.mxu0 %v1617
    %1628 = vmatprep.subr.bf16.mxu0 0
    %1629 = vmatpush1.bf16.msra.mxu0 %v1616
    %1630 = vmatprep.subr.bf16.mxu0 0
    %1631 = vmatpush1.bf16.msra.mxu0 %v1615
    %1632 = vmatprep.subr.bf16.mxu0 0
    %1633 = vmatpush1.bf16.msra.mxu0 %v1614
    %1634 = vmatprep.subr.bf16.mxu0 0
    %1635 = vmatpush1.bf16.msra.mxu0 %v1613
    %1636 = vmatprep.subr.bf16.mxu0 0
    %1637 = vmatpush1.bf16.msra.mxu0 %v1612
    %1638 = vmatprep.subr.bf16.mxu0 0
    %1639 = vmatpush1.bf16.msra.mxu0 %v1611
    %1640 = vmatprep.subr.bf16.mxu0 0
    %1641 = vmatpush1.bf16.msra.mxu0 %v1610
    %1642 = vmatprep.subr.bf16.mxu0 0
    %1643 = vmatpush2.bf16.msra.mxu0 0
    %1644 = vmatprep.subr.bf16.mxu0 0
    %1645 = vmatpush2.bf16.msra.mxu0 0
    %1646 = vmatprep.subr.bf16.mxu0 0
    %1647 = vmatpush2.bf16.msra.mxu0 0
    %1648 = vmatprep.subr.bf16.mxu0 0
    %1649 = vmatpush2.bf16.msra.mxu0 0
    %1650 = vmatprep.subr.bf16.mxu0 0
    %1651 = vmatpush2.bf16.msra.mxu0 0
    %1652 = vmatprep.subr.bf16.mxu0 0
    %1653 = vmatpush2.bf16.msra.mxu0 0
    %1654 = vmatprep.subr.bf16.mxu0 0
    %1655 = vmatpush2.bf16.msra.mxu0 0
    %1656 = vmatprep.subr.bf16.mxu0 0
    %1657 = vmatpush2.bf16.msra.mxu0 0
    %1658 = vmatprep.mubr.bf16.mxu0 0
    %1659 = vmatmul.mubr.bf16.gmra.mxu0 %v1554
    %v1660 = vpop.f32.mrf.mxu0
    %v1661 = vadd.f32 %v1576, %v1660
    %v1662 = vpop.f32.mrf.mxu0
    %v1663 = vpop.f32.mrf.mxu0
    %v1664 = vpop.f32.mrf.mxu0
    %1665 = vdwg.mxu0
    %1666 = vst [vmem:[%s9] sm:$0xff] %v1661
    // Predicated region
    $region54: #{gaze_encoder_ms_forward.1} parent=1 // pred_check
      _
    $region55: #{gaze_encoder_ms_forward.1} parent=1 // pred_check_branch
      %1668 = sbr.rel (0) target = $region57
    $region56: #{gaze_encoder_ms_forward.1} parent=1 // pred_region
      _
    $region57: #{gaze_encoder_ms_forward.1} parent=1 // pred_fallthru
      _
    // Predicated region
    $region58: #{gaze_encoder_ms_forward.1} parent=1 // pred_check
      _
    $region59: #{gaze_encoder_ms_forward.1} parent=1 // pred_check_branch
      %1670 = sbr.rel (0) target = $region61
    $region60: #{gaze_encoder_ms_forward.1} parent=1 // pred_region
      _
    $region61: #{gaze_encoder_ms_forward.1} parent=1 // pred_fallthru
      _
    %1671 = vsyncpa [#allocation3], 1
    %1672 = vsyncpa [#allocation5], 1
    %1673 = vsyncpa [#allocation8], 1

</llo_original>
